<compile_context>
chip_gen: v5e
topology: v5e:2x2
jax: 0.10.0
libtpu: 0.0.40
codegen_flags: <defaults>
</compile_context>

<pallas_src>
import numpy as np
import jax
import jax.numpy as jnp
from jax import lax
from jax.experimental import pallas as pl
from jax.experimental.pallas import tpu as pltpu

# Small, module-consistent shapes (module defaults are input_size=71, hidden=256).
INPUT_SIZE = 16   # "input_size"  (channels / features)
HIDDEN_SIZE = 32  # "hidden_size"
NUM_LAYERS = 2    # kernel hardcodes the module's num_layers=2
SEQ_LEN = 8       # sequence length T


def mini_layer_kernel(x_ref, w_ref, b_ref, out_ref, hseq_ref, gb_ref):
    T = out_ref.shape[0]
    CP = out_ref.shape[1]            # lane-padded output width (multiple of 128)
    H2 = hseq_ref.shape[1]           # 2*H  (packed [layer1 | layer2])
    H = H2 // 2
    C3 = x_ref.shape[1]              # 3*C  (im2col width)
    C = C3 // 3

    # Static row offsets inside the packed bf16 weight slab.
    R_WIH = C3                       # spread layer-1 input weight   (C,  8H)
    R_WC = C3 + C                    # block-stacked recurrent weight (2H, 8H)
    R_FC = R_WC + H2                 # fc weight (2H, CP); top-H rows are zero

    bf16 = jnp.bfloat16
    f32 = jnp.float32

    # ---- Conv1d(kernel=3, padding='same') as ONE im2col matmul + ReLU (throughput) ----
    y = jnp.dot(x_ref[...].astype(bf16), w_ref[0:C3, 0:C],
                preferred_element_type=f32) + b_ref[0:1, 0:C]
    y = jnp.maximum(y, 0.0)

    # ---- additive gate term for every step, already in permuted gate layout ----
    # layer-1 lanes: 0.5-scaled(i/f/o) (y @ w_ih_l0 + b_l0); layer-2 lanes: scaled b_l1.
    gb_ref[0:T, :] = jnp.dot(y.astype(bf16), w_ref[R_WIH:R_WC, :],
                             preferred_element_type=f32) + b_ref[1:2, :]
    gb_ref[T:T + 1, :] = b_ref[2:3, :]   # uniform "epilogue" row (layer-1 lanes zero)

    # ---- prologue: layer-1 step 0 (zero initial state => gates are gb[0] l1 lanes) ----
    a0 = jnp.tanh(gb_ref[0:1, :])                        # one EUP push
    i1 = 0.5 * a0[:, 0:H] + 0.5
    g1 = a0[:, 2 * H2:2 * H2 + H]
    o1 = 0.5 * a0[:, 3 * H2:3 * H2 + H] + 0.5
    c1 = i1 * g1
    h1 = o1 * jnp.tanh(c1)
    zH = jnp.zeros((1, H), f32)
    h12 = jnp.concatenate([h1, zH], axis=1)              # packed [h1 | h2]
    c12 = jnp.concatenate([c1, zH], axis=1)

    # ---- wavefront: iteration t = layer-1 step t + layer-2 step t-1.  At t == T only
    # the layer-2 half is meaningful (layer-1 lanes are garbage but masked out by the
    # zero fc rows).  One MXU push + two EUP pushes per serial step; state in vregs. ----
    for t in range(1, T + 1):
        g = jnp.dot(h12.astype(bf16), w_ref[R_WC:R_FC, :],
                    preferred_element_type=f32) + gb_ref[t:t + 1, :]   # (1, 8H)
        a = jnp.tanh(g)                                  # all 8 gates, one push
        i12 = 0.5 * a[:, 0:H2] + 0.5
        f12 = 0.5 * a[:, H2:2 * H2] + 0.5
        g12 = a[:, 2 * H2:3 * H2]
        o12 = 0.5 * a[:, 3 * H2:4 * H2] + 0.5
        c12 = f12 * c12 + i12 * g12
        h12 = o12 * jnp.tanh(c12)                        # one push for both cell tanhs
        hseq_ref[t - 1:t, :] = h12   # layer-2 half = h2_{t-1}; layer-1 half unused

    # ---- fcMid: Linear(H -> C); fc rows for the layer-1 half are zero; lane-dense out ----
    out_ref[...] = jnp.dot(hseq_ref[...].astype(bf16), w_ref[R_FC:R_FC + H2, 0:CP],
                           preferred_element_type=f32) + b_ref[3:4, 0:CP]


def _spread_gates(wa, wb, H):
    """Interleave two gate-blocked (R, 4H) arrays into (R, 8H) columns ordered
    [a_i b_i | a_f b_f | a_g b_g | a_o b_o] (each sub-block H wide)."""
    R = wa.shape[0]
    return jnp.stack([wa.reshape(R, 4, H), wb.reshape(R, 4, H)],
                     axis=2).reshape(R, 8 * H)


def mini_layer_forward(x, p):
    T, C = x.shape
    H = p["w_hh_l0"].shape[0]
    H2, H8 = 2 * H, 8 * H
    c_pad = ((C + 127) // 128) * 128             # lane-dense output width
    # Slab layout assumes bf16 sublane-tile-aligned section starts and 8H >= c_pad.
    assert C % 16 == 0 and H % 16 == 0 and H8 >= c_pad

    f32, bf16 = jnp.float32, jnp.bfloat16

    # -- wrapper-side glue: im2col for the 'same' conv --
    zrow = jnp.zeros((1, C), f32)
    x_im2col = jnp.concatenate(
        [jnp.concatenate([zrow, x[:-1]], 0), x, jnp.concatenate([x[1:], zrow], 0)],
        axis=1)                                   # (T, 3C)

    # -- permuted gate layout [i1 i2 | f1 f2 | g1 g2 | o1 o2]; 0.5 baked into i/f/o --
    gsc4 = jnp.concatenate([jnp.full((1, H), 0.5), jnp.full((1, H), 0.5),
                            jnp.ones((1, H)), jnp.full((1, H), 0.5)], axis=1)
    gsc8 = _spread_gates(gsc4, gsc4, H)           # (1, 8H) per-column scale

    z4h = lambda r: jnp.zeros((r, 4 * H), f32)
    wih0p = _spread_gates(p["w_ih_l0"], z4h(C), H) * gsc8             # (C, 8H)
    wcomb = jnp.concatenate([
        _spread_gates(p["w_hh_l0"], p["w_ih_l1"], H),                 # h1 rows
        _spread_gates(z4h(H), p["w_hh_l1"], H),                       # h2 rows
    ], axis=0) * gsc8                                                 # (2H, 8H)
    b01 = _spread_gates(p["b_l0"], p["b_l1"], H) * gsc8               # (1, 8H)
    b1only = _spread_gates(z4h(1), p["b_l1"], H) * gsc8               # (1, 8H)

    # -- ONE bf16 weight slab (lane-dense, 8H wide): conv | wih0p | wcomb | fc --
    cw_flat = p["conv_w"].reshape(3 * C, C)                           # [W0; W1; W2]
    wslab = jnp.zeros((4 * C + 4 * H, H8), f32)
    wslab = wslab.at[0:3 * C, 0:C].set(cw_flat)
    wslab = wslab.at[3 * C:4 * C, :].set(wih0p)
    wslab = wslab.at[4 * C:4 * C + H2, :].set(wcomb)
    wslab = wslab.at[4 * C + H2 + H:4 * C + 2 * H2, 0:C].set(p["fc_w"])  # h1 rows stay 0
    wslab = wslab.astype(bf16)

    # -- ONE f32 bias/aux slab --
    bslab = jnp.zeros((4, H8), f32)
    bslab = bslab.at[0:1, 0:C].set(p["conv_b"])
    bslab = bslab.at[1:2, :].set(b01)
    bslab = bslab.at[2:3, :].set(b1only)
    bslab = bslab.at[3:4, 0:C].set(p["fc_b"])

    out = pl.pallas_call(
        mini_layer_kernel,
        out_shape=jax.ShapeDtypeStruct((T, c_pad), f32),
        in_specs=[pl.BlockSpec(memory_space=pltpu.MemorySpace.VMEM)] * 3,
        out_specs=pl.BlockSpec(memory_space=pltpu.MemorySpace.VMEM),
        scratch_shapes=[pltpu.VMEM((T, H2), f32),        # packed [h1|h2] hidden sequence
                        pltpu.VMEM((T + 1, H8), f32)],   # per-step additive gate terms
    )(x_im2col, wslab, bslab)
    return out[:, :C]


def mini_layer_reference(x, p):
    """Pure-JAX f32 reference with identical semantics to the PyTorch module."""
    T, C = x.shape
    H = p["w_hh_l0"].shape[0]
    zrow = jnp.zeros((1, C), jnp.float32)
    xm1 = jnp.concatenate([zrow, x[:-1]], axis=0)
    xp1 = jnp.concatenate([x[1:], zrow], axis=0)
    y = (xm1 @ p["conv_w"][0] + x @ p["conv_w"][1] + xp1 @ p["conv_w"][2]
         + p["conv_b"])
    y = jnp.maximum(y, 0.0)

    def lstm_layer(inp, w_ih, w_hh, b):
        gx = inp @ w_ih + b[0]

        def step(carry, g_x):
            h, c = carry
            g = g_x + h @ w_hh
            i = jax.nn.sigmoid(g[0:H])
            f = jax.nn.sigmoid(g[H:2 * H])
            gg = jnp.tanh(g[2 * H:3 * H])
            o = jax.nn.sigmoid(g[3 * H:4 * H])
            c = f * c + i * gg
            h = o * jnp.tanh(c)
            return (h, c), h

        _, hs = lax.scan(step, (jnp.zeros(H), jnp.zeros(H)), gx)
        return hs

    h1 = lstm_layer(y, p["w_ih_l0"], p["w_hh_l0"], p["b_l0"])
    h2 = lstm_layer(h1, p["w_ih_l1"], p["w_hh_l1"], p["b_l1"])
    return h2 @ p["fc_w"] + p["fc_b"]


def init_params(key, input_size, hidden_size):
    C, H = input_size, hidden_size
    ks = jax.random.split(key, 10)
    u = lambda k, shape, s: jax.random.uniform(k, shape, jnp.float32, -s, s)
    return dict(
        # conv_w[k] == torch Conv1d weight[:, :, k].T  -> (C_in, C_out)
        conv_w=u(ks[0], (3, C, C), 0.1),
        conv_b=u(ks[1], (1, C), 0.1),
        w_ih_l0=u(ks[2], (C, 4 * H), 0.1),   # torch weight_ih_l0.T
        w_hh_l0=u(ks[3], (H, 4 * H), 0.1),   # torch weight_hh_l0.T
        b_l0=u(ks[4], (1, 4 * H), 0.1),      # b_ih_l0 + b_hh_l0 (combined)
        w_ih_l1=u(ks[5], (H, 4 * H), 0.1),
        w_hh_l1=u(ks[6], (H, 4 * H), 0.1),
        b_l1=u(ks[7], (1, 4 * H), 0.1),
        fc_w=u(ks[8], (H, C), 0.1),          # torch fcMid.weight.T
        fc_b=u(ks[9], (1, C), 0.1),
    )


if __name__ == "__main__":
    key = jax.random.PRNGKey(0)
    kx, kp = jax.random.split(key)
    x = jax.random.normal(kx, (SEQ_LEN, INPUT_SIZE), dtype=jnp.float32)
    params = init_params(kp, INPUT_SIZE, HIDDEN_SIZE)

    fwd = jax.jit(mini_layer_forward)
    out = jax.block_until_ready(fwd(x, params))

    ref = mini_layer_reference(x, params)
    # Kernel uses bf16 matmul operands (f32 accumulation); compare against the pure-f32
    # reference with a correspondingly relaxed tolerance.
    np.testing.assert_allclose(np.asarray(out), np.asarray(ref), rtol=1e-2, atol=5e-3)
    assert out.shape == (SEQ_LEN, INPUT_SIZE)
    print("KERNEL_OK")
</pallas_src>

<mosaic_0001>
module attributes {stable_mosaic.version = 11 : i64} {
  func.func @mini_layer_kernel(%arg0: memref<8x48xf32, #tpu.memory_space<vmem>>, %arg1: memref<192x256xbf16, #tpu.memory_space<vmem>>, %arg2: memref<4x256xf32, #tpu.memory_space<vmem>>, %arg3: memref<8x128xf32, #tpu.memory_space<vmem>>, %arg4: memref<8x64xf32, #tpu.memory_space<vmem>>, %arg5: memref<9x256xf32, #tpu.memory_space<vmem>>) attributes {dimension_semantics = [], scalar_prefetch = 0 : i64, scratch_operands = 2 : i64, tpu.core_type = #tpu.core_type<tc>} {
    %c0 = arith.constant 0 : index
    %c0_0 = arith.constant 0 : index
    %0 = vector.load %arg0[%c0, %c0_0] : memref<8x48xf32, #tpu.memory_space<vmem>>, vector<8x48xf32>
    %1 = arith.truncf %0 : vector<8x48xf32> to vector<8x48xbf16>
    %c0_1 = arith.constant 0 : index
    %c0_2 = arith.constant 0 : index
    %2 = vector.load %arg1[%c0_1, %c0_2] : memref<192x256xbf16, #tpu.memory_space<vmem>>, vector<48x16xbf16>
    %cst = arith.constant dense<0.000000e+00> : vector<8x16xf32>
    %3 = tpu.matmul %1, %2, %cst {dimension_numbers = #tpu.dot_dimension_numbers<[1], [0], [0], [1], [0, 0, 1, 1], [], []>} : vector<8x48xbf16>, vector<48x16xbf16>, vector<8x16xf32> -> vector<8x16xf32>
    %c0_3 = arith.constant 0 : index
    %c0_4 = arith.constant 0 : index
    %4 = vector.load %arg2[%c0_3, %c0_4] : memref<4x256xf32, #tpu.memory_space<vmem>>, vector<1x16xf32>
    %5 = vector.broadcast %4 : vector<1x16xf32> to vector<8x16xf32>
    %6 = arith.addf %3, %5 : vector<8x16xf32>
    %cst_5 = arith.constant 0.000000e+00 : f32
    %7 = vector.broadcast %cst_5 : f32 to vector<8x16xf32>
    %8 = arith.maximumf %6, %7 : vector<8x16xf32>
    %9 = arith.truncf %8 : vector<8x16xf32> to vector<8x16xbf16>
    %c48 = arith.constant 48 : index
    %c0_6 = arith.constant 0 : index
    %10 = vector.load %arg1[%c48, %c0_6] : memref<192x256xbf16, #tpu.memory_space<vmem>>, vector<16x256xbf16>
    %cst_7 = arith.constant dense<0.000000e+00> : vector<8x256xf32>
    %11 = tpu.matmul %9, %10, %cst_7 {dimension_numbers = #tpu.dot_dimension_numbers<[1], [0], [0], [1], [0, 0, 1, 1], [], []>} : vector<8x16xbf16>, vector<16x256xbf16>, vector<8x256xf32> -> vector<8x256xf32>
    %c1 = arith.constant 1 : index
    %c0_8 = arith.constant 0 : index
    %12 = vector.load %arg2[%c1, %c0_8] : memref<4x256xf32, #tpu.memory_space<vmem>>, vector<1x256xf32>
    %13 = vector.broadcast %12 : vector<1x256xf32> to vector<8x256xf32>
    %14 = arith.addf %11, %13 : vector<8x256xf32>
    %c0_9 = arith.constant 0 : index
    %c0_10 = arith.constant 0 : index
    %15 = vector.load %arg5[%c0_9, %c0_10] : memref<9x256xf32, #tpu.memory_space<vmem>>, vector<8x256xf32>
    tpu.vector_store %arg5[%c0_9, %c0_10], %14 {strides = array<i32>} : memref<9x256xf32, #tpu.memory_space<vmem>>, vector<8x256xf32>,
    %c2 = arith.constant 2 : index
    %c0_11 = arith.constant 0 : index
    %16 = vector.load %arg2[%c2, %c0_11] : memref<4x256xf32, #tpu.memory_space<vmem>>, vector<1x256xf32>
    %c8 = arith.constant 8 : index
    %c0_12 = arith.constant 0 : index
    %17 = vector.load %arg5[%c8, %c0_12] : memref<9x256xf32, #tpu.memory_space<vmem>>, vector<1x256xf32>
    tpu.vector_store %arg5[%c8, %c0_12], %16 {strides = array<i32>} : memref<9x256xf32, #tpu.memory_space<vmem>>, vector<1x256xf32>,
    %c0_13 = arith.constant 0 : index
    %c0_14 = arith.constant 0 : index
    %18 = vector.load %arg5[%c0_13, %c0_14] : memref<9x256xf32, #tpu.memory_space<vmem>>, vector<1x256xf32>
    %19 = math.tanh %18 : vector<1x256xf32>
    %20 = vector.extract_strided_slice %19 {offsets = [0, 0], sizes = [1, 32], strides = [1, 1]} : vector<1x256xf32> to vector<1x32xf32>
    %cst_15 = arith.constant 5.000000e-01 : f32
    %21 = vector.broadcast %cst_15 : f32 to vector<1x32xf32>
    %22 = arith.mulf %21, %20 : vector<1x32xf32>
    %cst_16 = arith.constant 5.000000e-01 : f32
    %23 = vector.broadcast %cst_16 : f32 to vector<1x32xf32>
    %24 = arith.addf %22, %23 : vector<1x32xf32>
    %25 = vector.extract_strided_slice %19 {offsets = [0, 128], sizes = [1, 32], strides = [1, 1]} : vector<1x256xf32> to vector<1x32xf32>
    %26 = vector.extract_strided_slice %19 {offsets = [0, 192], sizes = [1, 32], strides = [1, 1]} : vector<1x256xf32> to vector<1x32xf32>
    %cst_17 = arith.constant 5.000000e-01 : f32
    %27 = vector.broadcast %cst_17 : f32 to vector<1x32xf32>
    %28 = arith.mulf %27, %26 : vector<1x32xf32>
    %cst_18 = arith.constant 5.000000e-01 : f32
    %29 = vector.broadcast %cst_18 : f32 to vector<1x32xf32>
    %30 = arith.addf %28, %29 : vector<1x32xf32>
    %31 = arith.mulf %24, %25 : vector<1x32xf32>
    %32 = math.tanh %31 : vector<1x32xf32>
    %33 = arith.mulf %30, %32 : vector<1x32xf32>
    %cst_19 = arith.constant 0.000000e+00 : f32
    %34 = vector.broadcast %cst_19 : f32 to vector<1x32xf32>
    %35 = tpu.concatenate %33, %34 in 1 : vector<1x32xf32>, vector<1x32xf32> -> vector<1x64xf32>
    %36 = tpu.concatenate %31, %34 in 1 : vector<1x32xf32>, vector<1x32xf32> -> vector<1x64xf32>
    %37 = arith.truncf %35 : vector<1x64xf32> to vector<1x64xbf16>
    %c64 = arith.constant 64 : index
    %c0_20 = arith.constant 0 : index
    %38 = vector.load %arg1[%c64, %c0_20] : memref<192x256xbf16, #tpu.memory_space<vmem>>, vector<64x256xbf16>
    %cst_21 = arith.constant dense<0.000000e+00> : vector<1x256xf32>
    %39 = tpu.matmul %37, %38, %cst_21 {dimension_numbers = #tpu.dot_dimension_numbers<[1], [0], [0], [1], [0, 0, 1, 1], [], []>} : vector<1x64xbf16>, vector<64x256xbf16>, vector<1x256xf32> -> vector<1x256xf32>
    %c1_22 = arith.constant 1 : index
    %c0_23 = arith.constant 0 : index
    %40 = vector.load %arg5[%c1_22, %c0_23] : memref<9x256xf32, #tpu.memory_space<vmem>>, vector<1x256xf32>
    %41 = arith.addf %39, %40 : vector<1x256xf32>
    %42 = math.tanh %41 : vector<1x256xf32>
    %43 = vector.extract_strided_slice %42 {offsets = [0, 0], sizes = [1, 64], strides = [1, 1]} : vector<1x256xf32> to vector<1x64xf32>
    %cst_24 = arith.constant 5.000000e-01 : f32
    %44 = vector.broadcast %cst_24 : f32 to vector<1x64xf32>
    %45 = arith.mulf %44, %43 : vector<1x64xf32>
    %cst_25 = arith.constant 5.000000e-01 : f32
    %46 = vector.broadcast %cst_25 : f32 to vector<1x64xf32>
    %47 = arith.addf %45, %46 : vector<1x64xf32>
    %48 = vector.extract_strided_slice %42 {offsets = [0, 64], sizes = [1, 64], strides = [1, 1]} : vector<1x256xf32> to vector<1x64xf32>
    %cst_26 = arith.constant 5.000000e-01 : f32
    %49 = vector.broadcast %cst_26 : f32 to vector<1x64xf32>
    %50 = arith.mulf %49, %48 : vector<1x64xf32>
    %cst_27 = arith.constant 5.000000e-01 : f32
    %51 = vector.broadcast %cst_27 : f32 to vector<1x64xf32>
    %52 = arith.addf %50, %51 : vector<1x64xf32>
    %53 = vector.extract_strided_slice %42 {offsets = [0, 128], sizes = [1, 64], strides = [1, 1]} : vector<1x256xf32> to vector<1x64xf32>
    %54 = vector.extract_strided_slice %42 {offsets = [0, 192], sizes = [1, 64], strides = [1, 1]} : vector<1x256xf32> to vector<1x64xf32>
    %cst_28 = arith.constant 5.000000e-01 : f32
    %55 = vector.broadcast %cst_28 : f32 to vector<1x64xf32>
    %56 = arith.mulf %55, %54 : vector<1x64xf32>
    %cst_29 = arith.constant 5.000000e-01 : f32
    %57 = vector.broadcast %cst_29 : f32 to vector<1x64xf32>
    %58 = arith.addf %56, %57 : vector<1x64xf32>
    %59 = arith.mulf %52, %36 : vector<1x64xf32>
    %60 = arith.mulf %47, %53 : vector<1x64xf32>
    %61 = arith.addf %59, %60 : vector<1x64xf32>
    %62 = math.tanh %61 : vector<1x64xf32>
    %63 = arith.mulf %58, %62 : vector<1x64xf32>
    %c0_30 = arith.constant 0 : index
    %c0_31 = arith.constant 0 : index
    %64 = vector.load %arg4[%c0_30, %c0_31] : memref<8x64xf32, #tpu.memory_space<vmem>>, vector<1x64xf32>
    tpu.vector_store %arg4[%c0_30, %c0_31], %63 {strides = array<i32>} : memref<8x64xf32, #tpu.memory_space<vmem>>, vector<1x64xf32>,
    %65 = arith.truncf %63 : vector<1x64xf32> to vector<1x64xbf16>
    %c64_32 = arith.constant 64 : index
    %c0_33 = arith.constant 0 : index
    %66 = vector.load %arg1[%c64_32, %c0_33] : memref<192x256xbf16, #tpu.memory_space<vmem>>, vector<64x256xbf16>
    %cst_34 = arith.constant dense<0.000000e+00> : vector<1x256xf32>
    %67 = tpu.matmul %65, %66, %cst_34 {dimension_numbers = #tpu.dot_dimension_numbers<[1], [0], [0], [1], [0, 0, 1, 1], [], []>} : vector<1x64xbf16>, vector<64x256xbf16>, vector<1x256xf32> -> vector<1x256xf32>
    %c2_35 = arith.constant 2 : index
    %c0_36 = arith.constant 0 : index
    %68 = vector.load %arg5[%c2_35, %c0_36] : memref<9x256xf32, #tpu.memory_space<vmem>>, vector<1x256xf32>
    %69 = arith.addf %67, %68 : vector<1x256xf32>
    %70 = math.tanh %69 : vector<1x256xf32>
    %71 = vector.extract_strided_slice %70 {offsets = [0, 0], sizes = [1, 64], strides = [1, 1]} : vector<1x256xf32> to vector<1x64xf32>
    %cst_37 = arith.constant 5.000000e-01 : f32
    %72 = vector.broadcast %cst_37 : f32 to vector<1x64xf32>
    %73 = arith.mulf %72, %71 : vector<1x64xf32>
    %cst_38 = arith.constant 5.000000e-01 : f32
    %74 = vector.broadcast %cst_38 : f32 to vector<1x64xf32>
    %75 = arith.addf %73, %74 : vector<1x64xf32>
    %76 = vector.extract_strided_slice %70 {offsets = [0, 64], sizes = [1, 64], strides = [1, 1]} : vector<1x256xf32> to vector<1x64xf32>
    %cst_39 = arith.constant 5.000000e-01 : f32
    %77 = vector.broadcast %cst_39 : f32 to vector<1x64xf32>
    %78 = arith.mulf %77, %76 : vector<1x64xf32>
    %cst_40 = arith.constant 5.000000e-01 : f32
    %79 = vector.broadcast %cst_40 : f32 to vector<1x64xf32>
    %80 = arith.addf %78, %79 : vector<1x64xf32>
    %81 = vector.extract_strided_slice %70 {offsets = [0, 128], sizes = [1, 64], strides = [1, 1]} : vector<1x256xf32> to vector<1x64xf32>
    %82 = vector.extract_strided_slice %70 {offsets = [0, 192], sizes = [1, 64], strides = [1, 1]} : vector<1x256xf32> to vector<1x64xf32>
    %cst_41 = arith.constant 5.000000e-01 : f32
    %83 = vector.broadcast %cst_41 : f32 to vector<1x64xf32>
    %84 = arith.mulf %83, %82 : vector<1x64xf32>
    %cst_42 = arith.constant 5.000000e-01 : f32
    %85 = vector.broadcast %cst_42 : f32 to vector<1x64xf32>
    %86 = arith.addf %84, %85 : vector<1x64xf32>
    %87 = arith.mulf %80, %61 : vector<1x64xf32>
    %88 = arith.mulf %75, %81 : vector<1x64xf32>
    %89 = arith.addf %87, %88 : vector<1x64xf32>
    %90 = math.tanh %89 : vector<1x64xf32>
    %91 = arith.mulf %86, %90 : vector<1x64xf32>
    %c1_43 = arith.constant 1 : index
    %c0_44 = arith.constant 0 : index
    %92 = vector.load %arg4[%c1_43, %c0_44] : memref<8x64xf32, #tpu.memory_space<vmem>>, vector<1x64xf32>
    tpu.vector_store %arg4[%c1_43, %c0_44], %91 {strides = array<i32>} : memref<8x64xf32, #tpu.memory_space<vmem>>, vector<1x64xf32>,
    %93 = arith.truncf %91 : vector<1x64xf32> to vector<1x64xbf16>
    %c64_45 = arith.constant 64 : index
    %c0_46 = arith.constant 0 : index
    %94 = vector.load %arg1[%c64_45, %c0_46] : memref<192x256xbf16, #tpu.memory_space<vmem>>, vector<64x256xbf16>
    %cst_47 = arith.constant dense<0.000000e+00> : vector<1x256xf32>
    %95 = tpu.matmul %93, %94, %cst_47 {dimension_numbers = #tpu.dot_dimension_numbers<[1], [0], [0], [1], [0, 0, 1, 1], [], []>} : vector<1x64xbf16>, vector<64x256xbf16>, vector<1x256xf32> -> vector<1x256xf32>
    %c3 = arith.constant 3 : index
    %c0_48 = arith.constant 0 : index
    %96 = vector.load %arg5[%c3, %c0_48] : memref<9x256xf32, #tpu.memory_space<vmem>>, vector<1x256xf32>
    %97 = arith.addf %95, %96 : vector<1x256xf32>
    %98 = math.tanh %97 : vector<1x256xf32>
    %99 = vector.extract_strided_slice %98 {offsets = [0, 0], sizes = [1, 64], strides = [1, 1]} : vector<1x256xf32> to vector<1x64xf32>
    %cst_49 = arith.constant 5.000000e-01 : f32
    %100 = vector.broadcast %cst_49 : f32 to vector<1x64xf32>
    %101 = arith.mulf %100, %99 : vector<1x64xf32>
    %cst_50 = arith.constant 5.000000e-01 : f32
    %102 = vector.broadcast %cst_50 : f32 to vector<1x64xf32>
    %103 = arith.addf %101, %102 : vector<1x64xf32>
    %104 = vector.extract_strided_slice %98 {offsets = [0, 64], sizes = [1, 64], strides = [1, 1]} : vector<1x256xf32> to vector<1x64xf32>
    %cst_51 = arith.constant 5.000000e-01 : f32
    %105 = vector.broadcast %cst_51 : f32 to vector<1x64xf32>
    %106 = arith.mulf %105, %104 : vector<1x64xf32>
    %cst_52 = arith.constant 5.000000e-01 : f32
    %107 = vector.broadcast %cst_52 : f32 to vector<1x64xf32>
    %108 = arith.addf %106, %107 : vector<1x64xf32>
    %109 = vector.extract_strided_slice %98 {offsets = [0, 128], sizes = [1, 64], strides = [1, 1]} : vector<1x256xf32> to vector<1x64xf32>
    %110 = vector.extract_strided_slice %98 {offsets = [0, 192], sizes = [1, 64], strides = [1, 1]} : vector<1x256xf32> to vector<1x64xf32>
    %cst_53 = arith.constant 5.000000e-01 : f32
    %111 = vector.broadcast %cst_53 : f32 to vector<1x64xf32>
    %112 = arith.mulf %111, %110 : vector<1x64xf32>
    %cst_54 = arith.constant 5.000000e-01 : f32
    %113 = vector.broadcast %cst_54 : f32 to vector<1x64xf32>
    %114 = arith.addf %112, %113 : vector<1x64xf32>
    %115 = arith.mulf %108, %89 : vector<1x64xf32>
    %116 = arith.mulf %103, %109 : vector<1x64xf32>
    %117 = arith.addf %115, %116 : vector<1x64xf32>
    %118 = math.tanh %117 : vector<1x64xf32>
    %119 = arith.mulf %114, %118 : vector<1x64xf32>
    %c2_55 = arith.constant 2 : index
    %c0_56 = arith.constant 0 : index
    %120 = vector.load %arg4[%c2_55, %c0_56] : memref<8x64xf32, #tpu.memory_space<vmem>>, vector<1x64xf32>
    tpu.vector_store %arg4[%c2_55, %c0_56], %119 {strides = array<i32>} : memref<8x64xf32, #tpu.memory_space<vmem>>, vector<1x64xf32>,
    %121 = arith.truncf %119 : vector<1x64xf32> to vector<1x64xbf16>
    %c64_57 = arith.constant 64 : index
    %c0_58 = arith.constant 0 : index
    %122 = vector.load %arg1[%c64_57, %c0_58] : memref<192x256xbf16, #tpu.memory_space<vmem>>, vector<64x256xbf16>
    %cst_59 = arith.constant dense<0.000000e+00> : vector<1x256xf32>
    %123 = tpu.matmul %121, %122, %cst_59 {dimension_numbers = #tpu.dot_dimension_numbers<[1], [0], [0], [1], [0, 0, 1, 1], [], []>} : vector<1x64xbf16>, vector<64x256xbf16>, vector<1x256xf32> -> vector<1x256xf32>
    %c4 = arith.constant 4 : index
    %c0_60 = arith.constant 0 : index
    %124 = vector.load %arg5[%c4, %c0_60] : memref<9x256xf32, #tpu.memory_space<vmem>>, vector<1x256xf32>
    %125 = arith.addf %123, %124 : vector<1x256xf32>
    %126 = math.tanh %125 : vector<1x256xf32>
    %127 = vector.extract_strided_slice %126 {offsets = [0, 0], sizes = [1, 64], strides = [1, 1]} : vector<1x256xf32> to vector<1x64xf32>
    %cst_61 = arith.constant 5.000000e-01 : f32
    %128 = vector.broadcast %cst_61 : f32 to vector<1x64xf32>
    %129 = arith.mulf %128, %127 : vector<1x64xf32>
    %cst_62 = arith.constant 5.000000e-01 : f32
    %130 = vector.broadcast %cst_62 : f32 to vector<1x64xf32>
    %131 = arith.addf %129, %130 : vector<1x64xf32>
    %132 = vector.extract_strided_slice %126 {offsets = [0, 64], sizes = [1, 64], strides = [1, 1]} : vector<1x256xf32> to vector<1x64xf32>
    %cst_63 = arith.constant 5.000000e-01 : f32
    %133 = vector.broadcast %cst_63 : f32 to vector<1x64xf32>
    %134 = arith.mulf %133, %132 : vector<1x64xf32>
    %cst_64 = arith.constant 5.000000e-01 : f32
    %135 = vector.broadcast %cst_64 : f32 to vector<1x64xf32>
    %136 = arith.addf %134, %135 : vector<1x64xf32>
    %137 = vector.extract_strided_slice %126 {offsets = [0, 128], sizes = [1, 64], strides = [1, 1]} : vector<1x256xf32> to vector<1x64xf32>
    %138 = vector.extract_strided_slice %126 {offsets = [0, 192], sizes = [1, 64], strides = [1, 1]} : vector<1x256xf32> to vector<1x64xf32>
    %cst_65 = arith.constant 5.000000e-01 : f32
    %139 = vector.broadcast %cst_65 : f32 to vector<1x64xf32>
    %140 = arith.mulf %139, %138 : vector<1x64xf32>
    %cst_66 = arith.constant 5.000000e-01 : f32
    %141 = vector.broadcast %cst_66 : f32 to vector<1x64xf32>
    %142 = arith.addf %140, %141 : vector<1x64xf32>
    %143 = arith.mulf %136, %117 : vector<1x64xf32>
    %144 = arith.mulf %131, %137 : vector<1x64xf32>
    %145 = arith.addf %143, %144 : vector<1x64xf32>
    %146 = math.tanh %145 : vector<1x64xf32>
    %147 = arith.mulf %142, %146 : vector<1x64xf32>
    %c3_67 = arith.constant 3 : index
    %c0_68 = arith.constant 0 : index
    %148 = vector.load %arg4[%c3_67, %c0_68] : memref<8x64xf32, #tpu.memory_space<vmem>>, vector<1x64xf32>
    tpu.vector_store %arg4[%c3_67, %c0_68], %147 {strides = array<i32>} : memref<8x64xf32, #tpu.memory_space<vmem>>, vector<1x64xf32>,
    %149 = arith.truncf %147 : vector<1x64xf32> to vector<1x64xbf16>
    %c64_69 = arith.constant 64 : index
    %c0_70 = arith.constant 0 : index
    %150 = vector.load %arg1[%c64_69, %c0_70] : memref<192x256xbf16, #tpu.memory_space<vmem>>, vector<64x256xbf16>
    %cst_71 = arith.constant dense<0.000000e+00> : vector<1x256xf32>
    %151 = tpu.matmul %149, %150, %cst_71 {dimension_numbers = #tpu.dot_dimension_numbers<[1], [0], [0], [1], [0, 0, 1, 1], [], []>} : vector<1x64xbf16>, vector<64x256xbf16>, vector<1x256xf32> -> vector<1x256xf32>
    %c5 = arith.constant 5 : index
    %c0_72 = arith.constant 0 : index
    %152 = vector.load %arg5[%c5, %c0_72] : memref<9x256xf32, #tpu.memory_space<vmem>>, vector<1x256xf32>
    %153 = arith.addf %151, %152 : vector<1x256xf32>
    %154 = math.tanh %153 : vector<1x256xf32>
    %155 = vector.extract_strided_slice %154 {offsets = [0, 0], sizes = [1, 64], strides = [1, 1]} : vector<1x256xf32> to vector<1x64xf32>
    %cst_73 = arith.constant 5.000000e-01 : f32
    %156 = vector.broadcast %cst_73 : f32 to vector<1x64xf32>
    %157 = arith.mulf %156, %155 : vector<1x64xf32>
    %cst_74 = arith.constant 5.000000e-01 : f32
    %158 = vector.broadcast %cst_74 : f32 to vector<1x64xf32>
    %159 = arith.addf %157, %158 : vector<1x64xf32>
    %160 = vector.extract_strided_slice %154 {offsets = [0, 64], sizes = [1, 64], strides = [1, 1]} : vector<1x256xf32> to vector<1x64xf32>
    %cst_75 = arith.constant 5.000000e-01 : f32
    %161 = vector.broadcast %cst_75 : f32 to vector<1x64xf32>
    %162 = arith.mulf %161, %160 : vector<1x64xf32>
    %cst_76 = arith.constant 5.000000e-01 : f32
    %163 = vector.broadcast %cst_76 : f32 to vector<1x64xf32>
    %164 = arith.addf %162, %163 : vector<1x64xf32>
    %165 = vector.extract_strided_slice %154 {offsets = [0, 128], sizes = [1, 64], strides = [1, 1]} : vector<1x256xf32> to vector<1x64xf32>
    %166 = vector.extract_strided_slice %154 {offsets = [0, 192], sizes = [1, 64], strides = [1, 1]} : vector<1x256xf32> to vector<1x64xf32>
    %cst_77 = arith.constant 5.000000e-01 : f32
    %167 = vector.broadcast %cst_77 : f32 to vector<1x64xf32>
    %168 = arith.mulf %167, %166 : vector<1x64xf32>
    %cst_78 = arith.constant 5.000000e-01 : f32
    %169 = vector.broadcast %cst_78 : f32 to vector<1x64xf32>
    %170 = arith.addf %168, %169 : vector<1x64xf32>
    %171 = arith.mulf %164, %145 : vector<1x64xf32>
    %172 = arith.mulf %159, %165 : vector<1x64xf32>
    %173 = arith.addf %171, %172 : vector<1x64xf32>
    %174 = math.tanh %173 : vector<1x64xf32>
    %175 = arith.mulf %170, %174 : vector<1x64xf32>
    %c4_79 = arith.constant 4 : index
    %c0_80 = arith.constant 0 : index
    %176 = vector.load %arg4[%c4_79, %c0_80] : memref<8x64xf32, #tpu.memory_space<vmem>>, vector<1x64xf32>
    tpu.vector_store %arg4[%c4_79, %c0_80], %175 {strides = array<i32>} : memref<8x64xf32, #tpu.memory_space<vmem>>, vector<1x64xf32>,
    %177 = arith.truncf %175 : vector<1x64xf32> to vector<1x64xbf16>
    %c64_81 = arith.constant 64 : index
    %c0_82 = arith.constant 0 : index
    %178 = vector.load %arg1[%c64_81, %c0_82] : memref<192x256xbf16, #tpu.memory_space<vmem>>, vector<64x256xbf16>
    %cst_83 = arith.constant dense<0.000000e+00> : vector<1x256xf32>
    %179 = tpu.matmul %177, %178, %cst_83 {dimension_numbers = #tpu.dot_dimension_numbers<[1], [0], [0], [1], [0, 0, 1, 1], [], []>} : vector<1x64xbf16>, vector<64x256xbf16>, vector<1x256xf32> -> vector<1x256xf32>
    %c6 = arith.constant 6 : index
    %c0_84 = arith.constant 0 : index
    %180 = vector.load %arg5[%c6, %c0_84] : memref<9x256xf32, #tpu.memory_space<vmem>>, vector<1x256xf32>
    %181 = arith.addf %179, %180 : vector<1x256xf32>
    %182 = math.tanh %181 : vector<1x256xf32>
    %183 = vector.extract_strided_slice %182 {offsets = [0, 0], sizes = [1, 64], strides = [1, 1]} : vector<1x256xf32> to vector<1x64xf32>
    %cst_85 = arith.constant 5.000000e-01 : f32
    %184 = vector.broadcast %cst_85 : f32 to vector<1x64xf32>
    %185 = arith.mulf %184, %183 : vector<1x64xf32>
    %cst_86 = arith.constant 5.000000e-01 : f32
    %186 = vector.broadcast %cst_86 : f32 to vector<1x64xf32>
    %187 = arith.addf %185, %186 : vector<1x64xf32>
    %188 = vector.extract_strided_slice %182 {offsets = [0, 64], sizes = [1, 64], strides = [1, 1]} : vector<1x256xf32> to vector<1x64xf32>
    %cst_87 = arith.constant 5.000000e-01 : f32
    %189 = vector.broadcast %cst_87 : f32 to vector<1x64xf32>
    %190 = arith.mulf %189, %188 : vector<1x64xf32>
    %cst_88 = arith.constant 5.000000e-01 : f32
    %191 = vector.broadcast %cst_88 : f32 to vector<1x64xf32>
    %192 = arith.addf %190, %191 : vector<1x64xf32>
    %193 = vector.extract_strided_slice %182 {offsets = [0, 128], sizes = [1, 64], strides = [1, 1]} : vector<1x256xf32> to vector<1x64xf32>
    %194 = vector.extract_strided_slice %182 {offsets = [0, 192], sizes = [1, 64], strides = [1, 1]} : vector<1x256xf32> to vector<1x64xf32>
    %cst_89 = arith.constant 5.000000e-01 : f32
    %195 = vector.broadcast %cst_89 : f32 to vector<1x64xf32>
    %196 = arith.mulf %195, %194 : vector<1x64xf32>
    %cst_90 = arith.constant 5.000000e-01 : f32
    %197 = vector.broadcast %cst_90 : f32 to vector<1x64xf32>
    %198 = arith.addf %196, %197 : vector<1x64xf32>
    %199 = arith.mulf %192, %173 : vector<1x64xf32>
    %200 = arith.mulf %187, %193 : vector<1x64xf32>
    %201 = arith.addf %199, %200 : vector<1x64xf32>
    %202 = math.tanh %201 : vector<1x64xf32>
    %203 = arith.mulf %198, %202 : vector<1x64xf32>
    %c5_91 = arith.constant 5 : index
    %c0_92 = arith.constant 0 : index
    %204 = vector.load %arg4[%c5_91, %c0_92] : memref<8x64xf32, #tpu.memory_space<vmem>>, vector<1x64xf32>
    tpu.vector_store %arg4[%c5_91, %c0_92], %203 {strides = array<i32>} : memref<8x64xf32, #tpu.memory_space<vmem>>, vector<1x64xf32>,
    %205 = arith.truncf %203 : vector<1x64xf32> to vector<1x64xbf16>
    %c64_93 = arith.constant 64 : index
    %c0_94 = arith.constant 0 : index
    %206 = vector.load %arg1[%c64_93, %c0_94] : memref<192x256xbf16, #tpu.memory_space<vmem>>, vector<64x256xbf16>
    %cst_95 = arith.constant dense<0.000000e+00> : vector<1x256xf32>
    %207 = tpu.matmul %205, %206, %cst_95 {dimension_numbers = #tpu.dot_dimension_numbers<[1], [0], [0], [1], [0, 0, 1, 1], [], []>} : vector<1x64xbf16>, vector<64x256xbf16>, vector<1x256xf32> -> vector<1x256xf32>
    %c7 = arith.constant 7 : index
    %c0_96 = arith.constant 0 : index
    %208 = vector.load %arg5[%c7, %c0_96] : memref<9x256xf32, #tpu.memory_space<vmem>>, vector<1x256xf32>
    %209 = arith.addf %207, %208 : vector<1x256xf32>
    %210 = math.tanh %209 : vector<1x256xf32>
    %211 = vector.extract_strided_slice %210 {offsets = [0, 0], sizes = [1, 64], strides = [1, 1]} : vector<1x256xf32> to vector<1x64xf32>
    %cst_97 = arith.constant 5.000000e-01 : f32
    %212 = vector.broadcast %cst_97 : f32 to vector<1x64xf32>
    %213 = arith.mulf %212, %211 : vector<1x64xf32>
    %cst_98 = arith.constant 5.000000e-01 : f32
    %214 = vector.broadcast %cst_98 : f32 to vector<1x64xf32>
    %215 = arith.addf %213, %214 : vector<1x64xf32>
    %216 = vector.extract_strided_slice %210 {offsets = [0, 64], sizes = [1, 64], strides = [1, 1]} : vector<1x256xf32> to vector<1x64xf32>
    %cst_99 = arith.constant 5.000000e-01 : f32
    %217 = vector.broadcast %cst_99 : f32 to vector<1x64xf32>
    %218 = arith.mulf %217, %216 : vector<1x64xf32>
    %cst_100 = arith.constant 5.000000e-01 : f32
    %219 = vector.broadcast %cst_100 : f32 to vector<1x64xf32>
    %220 = arith.addf %218, %219 : vector<1x64xf32>
    %221 = vector.extract_strided_slice %210 {offsets = [0, 128], sizes = [1, 64], strides = [1, 1]} : vector<1x256xf32> to vector<1x64xf32>
    %222 = vector.extract_strided_slice %210 {offsets = [0, 192], sizes = [1, 64], strides = [1, 1]} : vector<1x256xf32> to vector<1x64xf32>
    %cst_101 = arith.constant 5.000000e-01 : f32
    %223 = vector.broadcast %cst_101 : f32 to vector<1x64xf32>
    %224 = arith.mulf %223, %222 : vector<1x64xf32>
    %cst_102 = arith.constant 5.000000e-01 : f32
    %225 = vector.broadcast %cst_102 : f32 to vector<1x64xf32>
    %226 = arith.addf %224, %225 : vector<1x64xf32>
    %227 = arith.mulf %220, %201 : vector<1x64xf32>
    %228 = arith.mulf %215, %221 : vector<1x64xf32>
    %229 = arith.addf %227, %228 : vector<1x64xf32>
    %230 = math.tanh %229 : vector<1x64xf32>
    %231 = arith.mulf %226, %230 : vector<1x64xf32>
    %c6_103 = arith.constant 6 : index
    %c0_104 = arith.constant 0 : index
    %232 = vector.load %arg4[%c6_103, %c0_104] : memref<8x64xf32, #tpu.memory_space<vmem>>, vector<1x64xf32>
    tpu.vector_store %arg4[%c6_103, %c0_104], %231 {strides = array<i32>} : memref<8x64xf32, #tpu.memory_space<vmem>>, vector<1x64xf32>,
    %233 = arith.truncf %231 : vector<1x64xf32> to vector<1x64xbf16>
    %c64_105 = arith.constant 64 : index
    %c0_106 = arith.constant 0 : index
    %234 = vector.load %arg1[%c64_105, %c0_106] : memref<192x256xbf16, #tpu.memory_space<vmem>>, vector<64x256xbf16>
    %cst_107 = arith.constant dense<0.000000e+00> : vector<1x256xf32>
    %235 = tpu.matmul %233, %234, %cst_107 {dimension_numbers = #tpu.dot_dimension_numbers<[1], [0], [0], [1], [0, 0, 1, 1], [], []>} : vector<1x64xbf16>, vector<64x256xbf16>, vector<1x256xf32> -> vector<1x256xf32>
    %c8_108 = arith.constant 8 : index
    %c0_109 = arith.constant 0 : index
    %236 = vector.load %arg5[%c8_108, %c0_109] : memref<9x256xf32, #tpu.memory_space<vmem>>, vector<1x256xf32>
    %237 = arith.addf %235, %236 : vector<1x256xf32>
    %238 = math.tanh %237 : vector<1x256xf32>
    %239 = vector.extract_strided_slice %238 {offsets = [0, 0], sizes = [1, 64], strides = [1, 1]} : vector<1x256xf32> to vector<1x64xf32>
    %cst_110 = arith.constant 5.000000e-01 : f32
    %240 = vector.broadcast %cst_110 : f32 to vector<1x64xf32>
    %241 = arith.mulf %240, %239 : vector<1x64xf32>
    %cst_111 = arith.constant 5.000000e-01 : f32
    %242 = vector.broadcast %cst_111 : f32 to vector<1x64xf32>
    %243 = arith.addf %241, %242 : vector<1x64xf32>
    %244 = vector.extract_strided_slice %238 {offsets = [0, 64], sizes = [1, 64], strides = [1, 1]} : vector<1x256xf32> to vector<1x64xf32>
    %cst_112 = arith.constant 5.000000e-01 : f32
    %245 = vector.broadcast %cst_112 : f32 to vector<1x64xf32>
    %246 = arith.mulf %245, %244 : vector<1x64xf32>
    %cst_113 = arith.constant 5.000000e-01 : f32
    %247 = vector.broadcast %cst_113 : f32 to vector<1x64xf32>
    %248 = arith.addf %246, %247 : vector<1x64xf32>
    %249 = vector.extract_strided_slice %238 {offsets = [0, 128], sizes = [1, 64], strides = [1, 1]} : vector<1x256xf32> to vector<1x64xf32>
    %250 = vector.extract_strided_slice %238 {offsets = [0, 192], sizes = [1, 64], strides = [1, 1]} : vector<1x256xf32> to vector<1x64xf32>
    %cst_114 = arith.constant 5.000000e-01 : f32
    %251 = vector.broadcast %cst_114 : f32 to vector<1x64xf32>
    %252 = arith.mulf %251, %250 : vector<1x64xf32>
    %cst_115 = arith.constant 5.000000e-01 : f32
    %253 = vector.broadcast %cst_115 : f32 to vector<1x64xf32>
    %254 = arith.addf %252, %253 : vector<1x64xf32>
    %255 = arith.mulf %248, %229 : vector<1x64xf32>
    %256 = arith.mulf %243, %249 : vector<1x64xf32>
    %257 = arith.addf %255, %256 : vector<1x64xf32>
    %258 = math.tanh %257 : vector<1x64xf32>
    %259 = arith.mulf %254, %258 : vector<1x64xf32>
    %c7_116 = arith.constant 7 : index
    %c0_117 = arith.constant 0 : index
    %260 = vector.load %arg4[%c7_116, %c0_117] : memref<8x64xf32, #tpu.memory_space<vmem>>, vector<1x64xf32>
    tpu.vector_store %arg4[%c7_116, %c0_117], %259 {strides = array<i32>} : memref<8x64xf32, #tpu.memory_space<vmem>>, vector<1x64xf32>,
    %c0_118 = arith.constant 0 : index
    %c0_119 = arith.constant 0 : index
    %261 = vector.load %arg4[%c0_118, %c0_119] : memref<8x64xf32, #tpu.memory_space<vmem>>, vector<8x64xf32>
    %262 = arith.truncf %261 : vector<8x64xf32> to vector<8x64xbf16>
    %c128 = arith.constant 128 : index
    %c0_120 = arith.constant 0 : index
    %263 = vector.load %arg1[%c128, %c0_120] : memref<192x256xbf16, #tpu.memory_space<vmem>>, vector<64x128xbf16>
    %cst_121 = arith.constant dense<0.000000e+00> : vector<8x128xf32>
    %264 = tpu.matmul %262, %263, %cst_121 {dimension_numbers = #tpu.dot_dimension_numbers<[1], [0], [0], [1], [0, 0, 1, 1], [], []>} : vector<8x64xbf16>, vector<64x128xbf16>, vector<8x128xf32> -> vector<8x128xf32>
    %c3_122 = arith.constant 3 : index
    %c0_123 = arith.constant 0 : index
    %265 = vector.load %arg2[%c3_122, %c0_123] : memref<4x256xf32, #tpu.memory_space<vmem>>, vector<1x128xf32>
    %266 = vector.broadcast %265 : vector<1x128xf32> to vector<8x128xf32>
    %267 = arith.addf %264, %266 : vector<8x128xf32>
    %c0_124 = arith.constant 0 : index
    %c0_125 = arith.constant 0 : index
    %268 = vector.load %arg3[%c0_124, %c0_125] : memref<8x128xf32, #tpu.memory_space<vmem>>, vector<8x128xf32>
    tpu.vector_store %arg3[%c0_124, %c0_125], %267 {strides = array<i32>} : memref<8x128xf32, #tpu.memory_space<vmem>>, vector<8x128xf32>,
    return
  }
}

</mosaic_0001>

<llo_original>
// kernel: mini_layer_forward.1
$region0: #{mini_layer_forward.1}
  #allocation0 [shape = 'u32[]', space=smem, size = 0x4, offset = 0x4, fixed_abs, tag = 'smem constant byte address 0x4 - core index']
  #allocation1 [shape = 'u32[72,128]{1,0:T(1,128)}', space=vmem, size = 0x9000, scoped, tag = 'internal scratch']
  #allocation2 [shape = 'f32[8,64]{1,0:T(8,128)}', space=vmem, size = 0x1000, scoped, tag = 'scratch operand']
  #allocation3 [shape = 'f32[9,256]{1,0:T(8,128)}', space=vmem, size = 0x4000, scoped, tag = 'scratch operand']
  %s0 = inlined_call_operand.vmem [shape: f32[8,48], index: 0, kind: input, shape index: {}]
  %s1 = inlined_call_operand.vmem [shape: bf16[192,256], index: 1, kind: input, shape index: {}]
  %s2 = inlined_call_operand.vmem [shape: f32[4,256], index: 2, kind: input, shape index: {}]
  %s3 = inlined_call_operand.hbm [shape: f32[8,128], index: 3, kind: output, shape index: {}]
  %s4 = sld [smem:[#allocation0]]
  $region22: #{mini_layer_forward.1} parent=0
    _
  %s6 = ssub.s32 1, %s4
  %s7 = scalar_select 0, %s6, %s4
  $region1: #{mini_layer_forward.1} parent=0
    #allocation4 [shape = 'u8[4096]{0}', space=vmem, size = 0x1000, scoped, tag = 'output window, operand 0, single buffered']
    #allocation5 [shape = 's32[1]{0}', space=sflag, size = 0x4, scoped, tag = 'scoped memory for mini_layer_forward.1']
    %8 = vsyncpa [#allocation5], 0
    // Predicated region
    $region2: #{mini_layer_forward.1} parent=1 // pred_check
      _
    $region3: #{mini_layer_forward.1} parent=1 // pred_check_branch
      %10 = sbr.rel (0) target = $region5
    $region4: #{mini_layer_forward.1} parent=1 // pred_region
      _
    $region5: #{mini_layer_forward.1} parent=1 // pred_fallthru
      _
    // Predicated region
    $region6: #{mini_layer_forward.1} parent=1 // pred_check
      _
    $region7: #{mini_layer_forward.1} parent=1 // pred_check_branch
      %12 = sbr.rel (0) target = $region9
    $region8: #{mini_layer_forward.1} parent=1 // pred_region
      _
    $region9: #{mini_layer_forward.1} parent=1 // pred_fallthru
      _
    // Predicated region
    $region10: #{mini_layer_forward.1} parent=1 // pred_check
      _
    $region11: #{mini_layer_forward.1} parent=1 // pred_check_branch
      %14 = sbr.rel (0) target = $region13
    $region12: #{mini_layer_forward.1} parent=1 // pred_region
      _
    $region13: #{mini_layer_forward.1} parent=1 // pred_fallthru
      _
    %v16 = vld [vmem:[%s0] sm:$0xff]
    %v17 = vpack.c.bf16 %v16, %v16
    %v18 = vld [vmem:[%s1] sm:$0xf]
    %v19 = vld [vmem:[%s1 + $0x8] sm:$0xf]
    %v20 = vld [vmem:[%s1 + $0x10] sm:$0xf]
    %v21 = vld [vmem:[%s1 + $0x18] sm:$0xf]
    %v22 = vld [vmem:[%s1 + $0x20] sm:$0xf]
    %v23 = vld [vmem:[%s1 + $0x28] sm:$0xf]
    %v24 = vld [vmem:[%s2] sm:$0x1]
    %v25 = vperm.slane %v24, 0
    %v32 = vunpack.c.l.b16 %v18
    %v33 = vunpack.c.l.b16 %v19
    %v34 = vunpack.c.l.b16 %v20
    %v35 = vunpack.c.l.b16 %v21
    %v36 = vunpack.c.l.b16 %v22
    %v37 = vunpack.c.l.b16 %v23
    %v38 = vpack.c.b16 %v33, %v32
    %v39 = vpack.c.b16 %v35, %v34
    %v40 = vpack.c.b16 %v37, %v36
    %vm44 = vcmask 392192
    %v46 = vsel %vm44, %v17, 0
    %48 = vmatpush.bf16.msra.mxu0 0
    %49 = vmatpush.bf16.msra.mxu0 0
    %50 = vmatpush.bf16.msra.mxu0 0
    %51 = vmatpush.bf16.msra.mxu0 0
    %52 = vmatpush.bf16.msra.mxu0 0
    %53 = vmatpush.bf16.msra.mxu0 %v40
    %54 = vmatpush.bf16.msra.mxu0 %v39
    %55 = vmatpush.bf16.msra.mxu0 %v38
    %56 = vmatmul.bf16.gmra.mxu0 %v46
    %v57 = vpop.f32.mrf.mxu0
    %v58 = vadd.f32 %v25, %v57
    %v59 = vpop.f32.mrf.mxu0
    %60 = vdwg.mxu0
    %v61 = vmax.f32 %v58, 0.0
    %v62 = vpack.c.bf16 %v61, %v61
    %v63 = vld [vmem:[%s1 + $0x30] sm:$0xff]
    %v64 = vld [vmem:[%s1 + $0x38] sm:$0xff]
    %s65 = scalar_lea.vmem %s2, 1
    %v66 = vld [vmem:[%s65] ss:$4 sm:$0x3]
    %v68 = vperm.slane %v66, 0
    %v69 = vperm.slane %v66, 1
    %v74 = vunpack.c.l.b16 %v63
    %v75 = vunpack.c.h.b16 %v63
    %v76 = vunpack.c.l.b16 %v64
    %v77 = vunpack.c.h.b16 %v64
    %v78 = vpack.c.b16 %v76, %v74
    %v79 = vpack.c.b16 %v77, %v75
    %vm82 = vcmask 130048
    %v84 = vsel %vm82, %v62, 0
    %86 = vmatpush.bf16.msra.mxu0 0
    %87 = vmatpush.bf16.msra.mxu0 0
    %88 = vmatpush.bf16.msra.mxu0 0
    %89 = vmatpush.bf16.msra.mxu0 0
    %90 = vmatpush.bf16.msra.mxu0 0
    %91 = vmatpush.bf16.msra.mxu0 0
    %92 = vmatpush.bf16.msra.mxu0 0
    %93 = vmatpush.bf16.msra.mxu0 %v78
    %94 = vmatmul.bf16.gmra.mxu0 %v84
    %v95 = vpop.f32.mrf.mxu0
    %v96 = vadd.f32 %v68, %v95
    %v97 = vpop.f32.mrf.mxu0
    %98 = vdwg.mxu0
    %99 = vmatpush.bf16.msra.mxu0 0
    %100 = vmatpush.bf16.msra.mxu0 0
    %101 = vmatpush.bf16.msra.mxu0 0
    %102 = vmatpush.bf16.msra.mxu0 0
    %103 = vmatpush.bf16.msra.mxu0 0
    %104 = vmatpush.bf16.msra.mxu0 0
    %105 = vmatpush.bf16.msra.mxu0 0
    %106 = vmatpush.bf16.msra.mxu0 %v79
    %107 = vmatmul.bf16.gmra.mxu0 %v84
    %v108 = vpop.f32.mrf.mxu0
    %v109 = vadd.f32 %v69, %v108
    %v110 = vpop.f32.mrf.mxu0
    %111 = vdwg.mxu0
    %112 = vst [vmem:[#allocation3] sm:$0xff] %v96
    %113 = vst [vmem:[#allocation3 + $0x8] sm:$0xff] %v109
    %s114 = scalar_lea.vmem %s2, 2
    %v115 = vld [vmem:[%s114] ss:$4 sm:$0x3]
    %v116 = vlaneseq
    %vm117 = vcmp.ge.s32.totalorder %v116, 0
    %vm118 = vcmp.lt.s32.totalorder %v116, 256
    %vm119 = vmand %vm117, %vm118
    %s120 = scalar_lea.vmem [#allocation3], 16
    %121 = vst.msk [vmem:[%s120] ss:$8 sm:$0x3] %vm119, %v115
    %122 = vst.msk [vmem:[%s120] ss:$8 sm:$0x0] %vm119, %v115
    %v123 = vld [vmem:[#allocation3] ss:$8 sm:$0x3]
    %v124 = vtanh.pop %v123
    %v125 = vmul.f32 %v124, 0.5
    %v126 = vadd.f32 %v125, 0.5
    %128 = vrot.lane.b32.xlu0 %v124, 64
    %v129 = vpop.permute.xlu0 %128
    %v130 = vrot.slane %v129, 1
    %v132 = vmul.f32 %v130, 0.5
    %v133 = vadd.f32 %v132, 0.5
    %v134 = vrot.slane %v124, 1
    %v136 = vmul.f32 %v126, %v134
    %v137 = vtanh.pop %v136
    %v138 = vmul.f32 %v133, %v137
    %vm139 = vcmask 261120
    %v140 = vsel %vm139, %v138, 0.0
    %v141 = vsel %vm139, %v136, 0.0
    %v142 = vpack.c.bf16 %v140, %v140
    %v143 = vld [vmem:[%s1 + $0x40] sm:$0xff]
    %v144 = vld [vmem:[%s1 + $0x48] sm:$0xff]
    %v145 = vld [vmem:[%s1 + $0x50] sm:$0xff]
    %v146 = vld [vmem:[%s1 + $0x58] sm:$0xff]
    %v147 = vld [vmem:[%s1 + $0x60] sm:$0xff]
    %v148 = vld [vmem:[%s1 + $0x68] sm:$0xff]
    %v149 = vld [vmem:[%s1 + $0x70] sm:$0xff]
    %v150 = vld [vmem:[%s1 + $0x78] sm:$0xff]
    %s151 = scalar_lea.vmem [#allocation3], 1
    %v152 = vld [vmem:[%s151] ss:$8 sm:$0x3]
    %v161 = vunpack.c.l.b16 %v143
    %v162 = vunpack.c.h.b16 %v143
    %v163 = vunpack.c.l.b16 %v144
    %v164 = vunpack.c.h.b16 %v144
    %v165 = vunpack.c.l.b16 %v145
    %v166 = vunpack.c.h.b16 %v145
    %v167 = vunpack.c.l.b16 %v146
    %v168 = vunpack.c.h.b16 %v146
    %v169 = vunpack.c.l.b16 %v147
    %v170 = vunpack.c.h.b16 %v147
    %v171 = vunpack.c.l.b16 %v148
    %v172 = vunpack.c.h.b16 %v148
    %v173 = vunpack.c.l.b16 %v149
    %v174 = vunpack.c.h.b16 %v149
    %v175 = vunpack.c.l.b16 %v150
    %v176 = vunpack.c.h.b16 %v150
    %v177 = vpack.c.b16 %v163, %v161
    %v178 = vpack.c.b16 %v164, %v162
    %v179 = vpack.c.b16 %v167, %v165
    %v180 = vpack.c.b16 %v168, %v166
    %v181 = vpack.c.b16 %v171, %v169
    %v182 = vpack.c.b16 %v172, %v170
    %v183 = vpack.c.b16 %v175, %v173
    %v184 = vpack.c.b16 %v176, %v174
    %v194 = vperm.slane %v152, 0
    %v195 = vperm.slane %v152, 1
    %vm198 = vcmask 523264
    %v200 = vsel %vm198, %v142, 0
    %202 = vmatpush.bf16.msra.mxu0 0
    %203 = vmatpush.bf16.msra.mxu0 0
    %204 = vmatpush.bf16.msra.mxu0 0
    %205 = vmatpush.bf16.msra.mxu0 0
    %206 = vmatpush.bf16.msra.mxu0 %v183
    %207 = vmatpush.bf16.msra.mxu0 %v181
    %208 = vmatpush.bf16.msra.mxu0 %v179
    %209 = vmatpush.bf16.msra.mxu0 %v177
    %210 = vmatmul.bf16.gmra.mxu0 %v200
    %v211 = vpop.f32.mrf.mxu0
    %v212 = vadd.f32 %v194, %v211
    %v213 = vpop.f32.mrf.mxu0
    %214 = vdwg.mxu0
    %215 = vmatpush.bf16.msra.mxu0 0
    %216 = vmatpush.bf16.msra.mxu0 0
    %217 = vmatpush.bf16.msra.mxu0 0
    %218 = vmatpush.bf16.msra.mxu0 0
    %219 = vmatpush.bf16.msra.mxu0 %v184
    %220 = vmatpush.bf16.msra.mxu0 %v182
    %221 = vmatpush.bf16.msra.mxu0 %v180
    %222 = vmatpush.bf16.msra.mxu0 %v178
    %223 = vmatmul.bf16.gmra.mxu0 %v200
    %v224 = vpop.f32.mrf.mxu0
    %v225 = vadd.f32 %v195, %v224
    %v226 = vpop.f32.mrf.mxu0
    %227 = vdwg.mxu0
    %v228 = vtanh.pop %v212
    %v229 = vtanh.pop %v225
    %v230 = vmul.f32 %v228, 0.5
    %v231 = vadd.f32 %v230, 0.5
    %v232 = vmul.f32 %v229, 0.5
    %v233 = vadd.f32 %v232, 0.5
    %235 = vrot.lane.b32.xlu0 %v141, 64
    %v236 = vpop.permute.xlu0 %235
    %v238 = vmul.f32 %v231, %v236
    %v239 = vmul.f32 %v231, %v229
    %241 = vrot.lane.b32.xlu0 %v239, 64
    %v242 = vpop.permute.xlu0 %241
    %v244 = vadd.f32 %v238, %v242
    %v245 = vtanh.pop %v244
    %v246 = vmul.f32 %v233, %v245
    %248 = vrot.lane.b32.xlu0 %v246, 64
    %v249 = vpop.permute.xlu0 %248
    %vm251 = vcmask 516096
    %252 = vst.msk [vmem:[#allocation2] sm:$0x1] %vm251, %v249
    %v253 = vpack.c.bf16 %v246, %v246
    %v254 = vld [vmem:[%s1 + $0x40] sm:$0xff]
    %v255 = vld [vmem:[%s1 + $0x48] sm:$0xff]
    %v256 = vld [vmem:[%s1 + $0x50] sm:$0xff]
    %v257 = vld [vmem:[%s1 + $0x58] sm:$0xff]
    %v258 = vld [vmem:[%s1 + $0x60] sm:$0xff]
    %v259 = vld [vmem:[%s1 + $0x68] sm:$0xff]
    %v260 = vld [vmem:[%s1 + $0x70] sm:$0xff]
    %v261 = vld [vmem:[%s1 + $0x78] sm:$0xff]
    %s262 = scalar_lea.vmem [#allocation3], 2
    %v263 = vld [vmem:[%s262] ss:$8 sm:$0x3]
    %265 = vrot.lane.b32.xlu0 %v253, 64
    %v266 = vpop.permute.xlu0 %265
    %v275 = vunpack.c.l.b16 %v254
    %v276 = vunpack.c.h.b16 %v254
    %v277 = vunpack.c.l.b16 %v255
    %v278 = vunpack.c.h.b16 %v255
    %v279 = vunpack.c.l.b16 %v256
    %v280 = vunpack.c.h.b16 %v256
    %v281 = vunpack.c.l.b16 %v257
    %v282 = vunpack.c.h.b16 %v257
    %v283 = vunpack.c.l.b16 %v258
    %v284 = vunpack.c.h.b16 %v258
    %v285 = vunpack.c.l.b16 %v259
    %v286 = vunpack.c.h.b16 %v259
    %v287 = vunpack.c.l.b16 %v260
    %v288 = vunpack.c.h.b16 %v260
    %v289 = vunpack.c.l.b16 %v261
    %v290 = vunpack.c.h.b16 %v261
    %v291 = vpack.c.b16 %v277, %v275
    %v292 = vpack.c.b16 %v278, %v276
    %v293 = vpack.c.b16 %v281, %v279
    %v294 = vpack.c.b16 %v282, %v280
    %v295 = vpack.c.b16 %v285, %v283
    %v296 = vpack.c.b16 %v286, %v284
    %v297 = vpack.c.b16 %v289, %v287
    %v298 = vpack.c.b16 %v290, %v288
    %v308 = vperm.slane %v263, 0
    %v309 = vperm.slane %v263, 1
    %v313 = vsel %vm198, %v266, 0
    %315 = vmatpush.bf16.msra.mxu0 0
    %316 = vmatpush.bf16.msra.mxu0 0
    %317 = vmatpush.bf16.msra.mxu0 0
    %318 = vmatpush.bf16.msra.mxu0 0
    %319 = vmatpush.bf16.msra.mxu0 %v297
    %320 = vmatpush.bf16.msra.mxu0 %v295
    %321 = vmatpush.bf16.msra.mxu0 %v293
    %322 = vmatpush.bf16.msra.mxu0 %v291
    %323 = vmatmul.bf16.gmra.mxu0 %v313
    %v324 = vpop.f32.mrf.mxu0
    %v325 = vadd.f32 %v308, %v324
    %v326 = vpop.f32.mrf.mxu0
    %327 = vdwg.mxu0
    %328 = vmatpush.bf16.msra.mxu0 0
    %329 = vmatpush.bf16.msra.mxu0 0
    %330 = vmatpush.bf16.msra.mxu0 0
    %331 = vmatpush.bf16.msra.mxu0 0
    %332 = vmatpush.bf16.msra.mxu0 %v298
    %333 = vmatpush.bf16.msra.mxu0 %v296
    %334 = vmatpush.bf16.msra.mxu0 %v294
    %335 = vmatpush.bf16.msra.mxu0 %v292
    %336 = vmatmul.bf16.gmra.mxu0 %v313
    %v337 = vpop.f32.mrf.mxu0
    %v338 = vadd.f32 %v309, %v337
    %v339 = vpop.f32.mrf.mxu0
    %340 = vdwg.mxu0
    %v341 = vtanh.pop %v325
    %v342 = vtanh.pop %v338
    %v343 = vmul.f32 %v341, 0.5
    %v344 = vadd.f32 %v343, 0.5
    %v345 = vmul.f32 %v342, 0.5
    %v346 = vadd.f32 %v345, 0.5
    %v347 = vmul.f32 %v344, %v244
    %v348 = vmul.f32 %v344, %v342
    %350 = vrot.lane.b32.xlu0 %v348, 64
    %v351 = vpop.permute.xlu0 %350
    %v353 = vadd.f32 %v347, %v351
    %v354 = vtanh.pop %v353
    %v355 = vmul.f32 %v346, %v354
    %357 = vrot.lane.b32.xlu0 %v355, 64
    %v358 = vpop.permute.xlu0 %357
    %360 = vst.msk [vmem:[#allocation2 + $0x1] sm:$0x1] %vm251, %v358
    %v361 = vpack.c.bf16 %v355, %v355
    %v362 = vld [vmem:[%s1 + $0x40] sm:$0xff]
    %v363 = vld [vmem:[%s1 + $0x48] sm:$0xff]
    %v364 = vld [vmem:[%s1 + $0x50] sm:$0xff]
    %v365 = vld [vmem:[%s1 + $0x58] sm:$0xff]
    %v366 = vld [vmem:[%s1 + $0x60] sm:$0xff]
    %v367 = vld [vmem:[%s1 + $0x68] sm:$0xff]
    %v368 = vld [vmem:[%s1 + $0x70] sm:$0xff]
    %v369 = vld [vmem:[%s1 + $0x78] sm:$0xff]
    %s370 = scalar_lea.vmem [#allocation3], 3
    %v371 = vld [vmem:[%s370] ss:$8 sm:$0x3]
    %373 = vrot.lane.b32.xlu0 %v361, 64
    %v374 = vpop.permute.xlu0 %373
    %v383 = vunpack.c.l.b16 %v362
    %v384 = vunpack.c.h.b16 %v362
    %v385 = vunpack.c.l.b16 %v363
    %v386 = vunpack.c.h.b16 %v363
    %v387 = vunpack.c.l.b16 %v364
    %v388 = vunpack.c.h.b16 %v364
    %v389 = vunpack.c.l.b16 %v365
    %v390 = vunpack.c.h.b16 %v365
    %v391 = vunpack.c.l.b16 %v366
    %v392 = vunpack.c.h.b16 %v366
    %v393 = vunpack.c.l.b16 %v367
    %v394 = vunpack.c.h.b16 %v367
    %v395 = vunpack.c.l.b16 %v368
    %v396 = vunpack.c.h.b16 %v368
    %v397 = vunpack.c.l.b16 %v369
    %v398 = vunpack.c.h.b16 %v369
    %v399 = vpack.c.b16 %v385, %v383
    %v400 = vpack.c.b16 %v386, %v384
    %v401 = vpack.c.b16 %v389, %v387
    %v402 = vpack.c.b16 %v390, %v388
    %v403 = vpack.c.b16 %v393, %v391
    %v404 = vpack.c.b16 %v394, %v392
    %v405 = vpack.c.b16 %v397, %v395
    %v406 = vpack.c.b16 %v398, %v396
    %v416 = vperm.slane %v371, 0
    %v417 = vperm.slane %v371, 1
    %v421 = vsel %vm198, %v374, 0
    %423 = vmatpush.bf16.msra.mxu0 0
    %424 = vmatpush.bf16.msra.mxu0 0
    %425 = vmatpush.bf16.msra.mxu0 0
    %426 = vmatpush.bf16.msra.mxu0 0
    %427 = vmatpush.bf16.msra.mxu0 %v405
    %428 = vmatpush.bf16.msra.mxu0 %v403
    %429 = vmatpush.bf16.msra.mxu0 %v401
    %430 = vmatpush.bf16.msra.mxu0 %v399
    %431 = vmatmul.bf16.gmra.mxu0 %v421
    %v432 = vpop.f32.mrf.mxu0
    %v433 = vadd.f32 %v416, %v432
    %v434 = vpop.f32.mrf.mxu0
    %435 = vdwg.mxu0
    %436 = vmatpush.bf16.msra.mxu0 0
    %437 = vmatpush.bf16.msra.mxu0 0
    %438 = vmatpush.bf16.msra.mxu0 0
    %439 = vmatpush.bf16.msra.mxu0 0
    %440 = vmatpush.bf16.msra.mxu0 %v406
    %441 = vmatpush.bf16.msra.mxu0 %v404
    %442 = vmatpush.bf16.msra.mxu0 %v402
    %443 = vmatpush.bf16.msra.mxu0 %v400
    %444 = vmatmul.bf16.gmra.mxu0 %v421
    %v445 = vpop.f32.mrf.mxu0
    %v446 = vadd.f32 %v417, %v445
    %v447 = vpop.f32.mrf.mxu0
    %448 = vdwg.mxu0
    %v449 = vtanh.pop %v433
    %v450 = vtanh.pop %v446
    %v451 = vmul.f32 %v449, 0.5
    %v452 = vadd.f32 %v451, 0.5
    %v453 = vmul.f32 %v450, 0.5
    %v454 = vadd.f32 %v453, 0.5
    %v455 = vmul.f32 %v452, %v353
    %v456 = vmul.f32 %v452, %v450
    %458 = vrot.lane.b32.xlu0 %v456, 64
    %v459 = vpop.permute.xlu0 %458
    %v461 = vadd.f32 %v455, %v459
    %v462 = vtanh.pop %v461
    %v463 = vmul.f32 %v454, %v462
    %465 = vrot.lane.b32.xlu0 %v463, 64
    %v466 = vpop.permute.xlu0 %465
    %468 = vst.msk [vmem:[#allocation2 + $0x2] sm:$0x1] %vm251, %v466
    %v469 = vpack.c.bf16 %v463, %v463
    %v470 = vld [vmem:[%s1 + $0x40] sm:$0xff]
    %v471 = vld [vmem:[%s1 + $0x48] sm:$0xff]
    %v472 = vld [vmem:[%s1 + $0x50] sm:$0xff]
    %v473 = vld [vmem:[%s1 + $0x58] sm:$0xff]
    %v474 = vld [vmem:[%s1 + $0x60] sm:$0xff]
    %v475 = vld [vmem:[%s1 + $0x68] sm:$0xff]
    %v476 = vld [vmem:[%s1 + $0x70] sm:$0xff]
    %v477 = vld [vmem:[%s1 + $0x78] sm:$0xff]
    %s478 = scalar_lea.vmem [#allocation3], 4
    %v479 = vld [vmem:[%s478] ss:$8 sm:$0x3]
    %481 = vrot.lane.b32.xlu0 %v469, 64
    %v482 = vpop.permute.xlu0 %481
    %v491 = vunpack.c.l.b16 %v470
    %v492 = vunpack.c.h.b16 %v470
    %v493 = vunpack.c.l.b16 %v471
    %v494 = vunpack.c.h.b16 %v471
    %v495 = vunpack.c.l.b16 %v472
    %v496 = vunpack.c.h.b16 %v472
    %v497 = vunpack.c.l.b16 %v473
    %v498 = vunpack.c.h.b16 %v473
    %v499 = vunpack.c.l.b16 %v474
    %v500 = vunpack.c.h.b16 %v474
    %v501 = vunpack.c.l.b16 %v475
    %v502 = vunpack.c.h.b16 %v475
    %v503 = vunpack.c.l.b16 %v476
    %v504 = vunpack.c.h.b16 %v476
    %v505 = vunpack.c.l.b16 %v477
    %v506 = vunpack.c.h.b16 %v477
    %v507 = vpack.c.b16 %v493, %v491
    %v508 = vpack.c.b16 %v494, %v492
    %v509 = vpack.c.b16 %v497, %v495
    %v510 = vpack.c.b16 %v498, %v496
    %v511 = vpack.c.b16 %v501, %v499
    %v512 = vpack.c.b16 %v502, %v500
    %v513 = vpack.c.b16 %v505, %v503
    %v514 = vpack.c.b16 %v506, %v504
    %v524 = vperm.slane %v479, 0
    %v525 = vperm.slane %v479, 1
    %v529 = vsel %vm198, %v482, 0
    %531 = vmatpush.bf16.msra.mxu0 0
    %532 = vmatpush.bf16.msra.mxu0 0
    %533 = vmatpush.bf16.msra.mxu0 0
    %534 = vmatpush.bf16.msra.mxu0 0
    %535 = vmatpush.bf16.msra.mxu0 %v513
    %536 = vmatpush.bf16.msra.mxu0 %v511
    %537 = vmatpush.bf16.msra.mxu0 %v509
    %538 = vmatpush.bf16.msra.mxu0 %v507
    %539 = vmatmul.bf16.gmra.mxu0 %v529
    %v540 = vpop.f32.mrf.mxu0
    %v541 = vadd.f32 %v524, %v540
    %v542 = vpop.f32.mrf.mxu0
    %543 = vdwg.mxu0
    %544 = vmatpush.bf16.msra.mxu0 0
    %545 = vmatpush.bf16.msra.mxu0 0
    %546 = vmatpush.bf16.msra.mxu0 0
    %547 = vmatpush.bf16.msra.mxu0 0
    %548 = vmatpush.bf16.msra.mxu0 %v514
    %549 = vmatpush.bf16.msra.mxu0 %v512
    %550 = vmatpush.bf16.msra.mxu0 %v510
    %551 = vmatpush.bf16.msra.mxu0 %v508
    %552 = vmatmul.bf16.gmra.mxu0 %v529
    %v553 = vpop.f32.mrf.mxu0
    %v554 = vadd.f32 %v525, %v553
    %v555 = vpop.f32.mrf.mxu0
    %556 = vdwg.mxu0
    %v557 = vtanh.pop %v541
    %v558 = vtanh.pop %v554
    %v559 = vmul.f32 %v557, 0.5
    %v560 = vadd.f32 %v559, 0.5
    %v561 = vmul.f32 %v558, 0.5
    %v562 = vadd.f32 %v561, 0.5
    %v563 = vmul.f32 %v560, %v461
    %v564 = vmul.f32 %v560, %v558
    %566 = vrot.lane.b32.xlu0 %v564, 64
    %v567 = vpop.permute.xlu0 %566
    %v569 = vadd.f32 %v563, %v567
    %v570 = vtanh.pop %v569
    %v571 = vmul.f32 %v562, %v570
    %573 = vrot.lane.b32.xlu0 %v571, 64
    %v574 = vpop.permute.xlu0 %573
    %576 = vst.msk [vmem:[#allocation2 + $0x3] sm:$0x1] %vm251, %v574
    %v577 = vpack.c.bf16 %v571, %v571
    %v578 = vld [vmem:[%s1 + $0x40] sm:$0xff]
    %v579 = vld [vmem:[%s1 + $0x48] sm:$0xff]
    %v580 = vld [vmem:[%s1 + $0x50] sm:$0xff]
    %v581 = vld [vmem:[%s1 + $0x58] sm:$0xff]
    %v582 = vld [vmem:[%s1 + $0x60] sm:$0xff]
    %v583 = vld [vmem:[%s1 + $0x68] sm:$0xff]
    %v584 = vld [vmem:[%s1 + $0x70] sm:$0xff]
    %v585 = vld [vmem:[%s1 + $0x78] sm:$0xff]
    %s586 = scalar_lea.vmem [#allocation3], 5
    %v587 = vld [vmem:[%s586] ss:$8 sm:$0x3]
    %589 = vrot.lane.b32.xlu0 %v577, 64
    %v590 = vpop.permute.xlu0 %589
    %v599 = vunpack.c.l.b16 %v578
    %v600 = vunpack.c.h.b16 %v578
    %v601 = vunpack.c.l.b16 %v579
    %v602 = vunpack.c.h.b16 %v579
    %v603 = vunpack.c.l.b16 %v580
    %v604 = vunpack.c.h.b16 %v580
    %v605 = vunpack.c.l.b16 %v581
    %v606 = vunpack.c.h.b16 %v581
    %v607 = vunpack.c.l.b16 %v582
    %v608 = vunpack.c.h.b16 %v582
    %v609 = vunpack.c.l.b16 %v583
    %v610 = vunpack.c.h.b16 %v583
    %v611 = vunpack.c.l.b16 %v584
    %v612 = vunpack.c.h.b16 %v584
    %v613 = vunpack.c.l.b16 %v585
    %v614 = vunpack.c.h.b16 %v585
    %v615 = vpack.c.b16 %v601, %v599
    %v616 = vpack.c.b16 %v602, %v600
    %v617 = vpack.c.b16 %v605, %v603
    %v618 = vpack.c.b16 %v606, %v604
    %v619 = vpack.c.b16 %v609, %v607
    %v620 = vpack.c.b16 %v610, %v608
    %v621 = vpack.c.b16 %v613, %v611
    %v622 = vpack.c.b16 %v614, %v612
    %v632 = vperm.slane %v587, 0
    %v633 = vperm.slane %v587, 1
    %v637 = vsel %vm198, %v590, 0
    %639 = vmatpush.bf16.msra.mxu0 0
    %640 = vmatpush.bf16.msra.mxu0 0
    %641 = vmatpush.bf16.msra.mxu0 0
    %642 = vmatpush.bf16.msra.mxu0 0
    %643 = vmatpush.bf16.msra.mxu0 %v621
    %644 = vmatpush.bf16.msra.mxu0 %v619
    %645 = vmatpush.bf16.msra.mxu0 %v617
    %646 = vmatpush.bf16.msra.mxu0 %v615
    %647 = vmatmul.bf16.gmra.mxu0 %v637
    %v648 = vpop.f32.mrf.mxu0
    %v649 = vadd.f32 %v632, %v648
    %v650 = vpop.f32.mrf.mxu0
    %651 = vdwg.mxu0
    %652 = vmatpush.bf16.msra.mxu0 0
    %653 = vmatpush.bf16.msra.mxu0 0
    %654 = vmatpush.bf16.msra.mxu0 0
    %655 = vmatpush.bf16.msra.mxu0 0
    %656 = vmatpush.bf16.msra.mxu0 %v622
    %657 = vmatpush.bf16.msra.mxu0 %v620
    %658 = vmatpush.bf16.msra.mxu0 %v618
    %659 = vmatpush.bf16.msra.mxu0 %v616
    %660 = vmatmul.bf16.gmra.mxu0 %v637
    %v661 = vpop.f32.mrf.mxu0
    %v662 = vadd.f32 %v633, %v661
    %v663 = vpop.f32.mrf.mxu0
    %664 = vdwg.mxu0
    %v665 = vtanh.pop %v649
    %v666 = vtanh.pop %v662
    %v667 = vmul.f32 %v665, 0.5
    %v668 = vadd.f32 %v667, 0.5
    %v669 = vmul.f32 %v666, 0.5
    %v670 = vadd.f32 %v669, 0.5
    %v671 = vmul.f32 %v668, %v569
    %v672 = vmul.f32 %v668, %v666
    %674 = vrot.lane.b32.xlu0 %v672, 64
    %v675 = vpop.permute.xlu0 %674
    %v677 = vadd.f32 %v671, %v675
    %v678 = vtanh.pop %v677
    %v679 = vmul.f32 %v670, %v678
    %681 = vrot.lane.b32.xlu0 %v679, 64
    %v682 = vpop.permute.xlu0 %681
    %684 = vst.msk [vmem:[#allocation2 + $0x4] sm:$0x1] %vm251, %v682
    %v685 = vpack.c.bf16 %v679, %v679
    %v686 = vld [vmem:[%s1 + $0x40] sm:$0xff]
    %v687 = vld [vmem:[%s1 + $0x48] sm:$0xff]
    %v688 = vld [vmem:[%s1 + $0x50] sm:$0xff]
    %v689 = vld [vmem:[%s1 + $0x58] sm:$0xff]
    %v690 = vld [vmem:[%s1 + $0x60] sm:$0xff]
    %v691 = vld [vmem:[%s1 + $0x68] sm:$0xff]
    %v692 = vld [vmem:[%s1 + $0x70] sm:$0xff]
    %v693 = vld [vmem:[%s1 + $0x78] sm:$0xff]
    %s694 = scalar_lea.vmem [#allocation3], 6
    %v695 = vld [vmem:[%s694] ss:$8 sm:$0x3]
    %697 = vrot.lane.b32.xlu0 %v685, 64
    %v698 = vpop.permute.xlu0 %697
    %v707 = vunpack.c.l.b16 %v686
    %v708 = vunpack.c.h.b16 %v686
    %v709 = vunpack.c.l.b16 %v687
    %v710 = vunpack.c.h.b16 %v687
    %v711 = vunpack.c.l.b16 %v688
    %v712 = vunpack.c.h.b16 %v688
    %v713 = vunpack.c.l.b16 %v689
    %v714 = vunpack.c.h.b16 %v689
    %v715 = vunpack.c.l.b16 %v690
    %v716 = vunpack.c.h.b16 %v690
    %v717 = vunpack.c.l.b16 %v691
    %v718 = vunpack.c.h.b16 %v691
    %v719 = vunpack.c.l.b16 %v692
    %v720 = vunpack.c.h.b16 %v692
    %v721 = vunpack.c.l.b16 %v693
    %v722 = vunpack.c.h.b16 %v693
    %v723 = vpack.c.b16 %v709, %v707
    %v724 = vpack.c.b16 %v710, %v708
    %v725 = vpack.c.b16 %v713, %v711
    %v726 = vpack.c.b16 %v714, %v712
    %v727 = vpack.c.b16 %v717, %v715
    %v728 = vpack.c.b16 %v718, %v716
    %v729 = vpack.c.b16 %v721, %v719
    %v730 = vpack.c.b16 %v722, %v720
    %v740 = vperm.slane %v695, 0
    %v741 = vperm.slane %v695, 1
    %v745 = vsel %vm198, %v698, 0
    %747 = vmatpush.bf16.msra.mxu0 0
    %748 = vmatpush.bf16.msra.mxu0 0
    %749 = vmatpush.bf16.msra.mxu0 0
    %750 = vmatpush.bf16.msra.mxu0 0
    %751 = vmatpush.bf16.msra.mxu0 %v729
    %752 = vmatpush.bf16.msra.mxu0 %v727
    %753 = vmatpush.bf16.msra.mxu0 %v725
    %754 = vmatpush.bf16.msra.mxu0 %v723
    %755 = vmatmul.bf16.gmra.mxu0 %v745
    %v756 = vpop.f32.mrf.mxu0
    %v757 = vadd.f32 %v740, %v756
    %v758 = vpop.f32.mrf.mxu0
    %759 = vdwg.mxu0
    %760 = vmatpush.bf16.msra.mxu0 0
    %761 = vmatpush.bf16.msra.mxu0 0
    %762 = vmatpush.bf16.msra.mxu0 0
    %763 = vmatpush.bf16.msra.mxu0 0
    %764 = vmatpush.bf16.msra.mxu0 %v730
    %765 = vmatpush.bf16.msra.mxu0 %v728
    %766 = vmatpush.bf16.msra.mxu0 %v726
    %767 = vmatpush.bf16.msra.mxu0 %v724
    %768 = vmatmul.bf16.gmra.mxu0 %v745
    %v769 = vpop.f32.mrf.mxu0
    %v770 = vadd.f32 %v741, %v769
    %v771 = vpop.f32.mrf.mxu0
    %772 = vdwg.mxu0
    %v773 = vtanh.pop %v757
    %v774 = vtanh.pop %v770
    %v775 = vmul.f32 %v773, 0.5
    %v776 = vadd.f32 %v775, 0.5
    %v777 = vmul.f32 %v774, 0.5
    %v778 = vadd.f32 %v777, 0.5
    %v779 = vmul.f32 %v776, %v677
    %v780 = vmul.f32 %v776, %v774
    %782 = vrot.lane.b32.xlu0 %v780, 64
    %v783 = vpop.permute.xlu0 %782
    %v785 = vadd.f32 %v779, %v783
    %v786 = vtanh.pop %v785
    %v787 = vmul.f32 %v778, %v786
    %789 = vrot.lane.b32.xlu0 %v787, 64
    %v790 = vpop.permute.xlu0 %789
    %792 = vst.msk [vmem:[#allocation2 + $0x5] sm:$0x1] %vm251, %v790
    %v793 = vpack.c.bf16 %v787, %v787
    %v794 = vld [vmem:[%s1 + $0x40] sm:$0xff]
    %v795 = vld [vmem:[%s1 + $0x48] sm:$0xff]
    %v796 = vld [vmem:[%s1 + $0x50] sm:$0xff]
    %v797 = vld [vmem:[%s1 + $0x58] sm:$0xff]
    %v798 = vld [vmem:[%s1 + $0x60] sm:$0xff]
    %v799 = vld [vmem:[%s1 + $0x68] sm:$0xff]
    %v800 = vld [vmem:[%s1 + $0x70] sm:$0xff]
    %v801 = vld [vmem:[%s1 + $0x78] sm:$0xff]
    %s802 = scalar_lea.vmem [#allocation3], 7
    %v803 = vld [vmem:[%s802] ss:$8 sm:$0x3]
    %805 = vrot.lane.b32.xlu0 %v793, 64
    %v806 = vpop.permute.xlu0 %805
    %v815 = vunpack.c.l.b16 %v794
    %v816 = vunpack.c.h.b16 %v794
    %v817 = vunpack.c.l.b16 %v795
    %v818 = vunpack.c.h.b16 %v795
    %v819 = vunpack.c.l.b16 %v796
    %v820 = vunpack.c.h.b16 %v796
    %v821 = vunpack.c.l.b16 %v797
    %v822 = vunpack.c.h.b16 %v797
    %v823 = vunpack.c.l.b16 %v798
    %v824 = vunpack.c.h.b16 %v798
    %v825 = vunpack.c.l.b16 %v799
    %v826 = vunpack.c.h.b16 %v799
    %v827 = vunpack.c.l.b16 %v800
    %v828 = vunpack.c.h.b16 %v800
    %v829 = vunpack.c.l.b16 %v801
    %v830 = vunpack.c.h.b16 %v801
    %v831 = vpack.c.b16 %v817, %v815
    %v832 = vpack.c.b16 %v818, %v816
    %v833 = vpack.c.b16 %v821, %v819
    %v834 = vpack.c.b16 %v822, %v820
    %v835 = vpack.c.b16 %v825, %v823
    %v836 = vpack.c.b16 %v826, %v824
    %v837 = vpack.c.b16 %v829, %v827
    %v838 = vpack.c.b16 %v830, %v828
    %v848 = vperm.slane %v803, 0
    %v849 = vperm.slane %v803, 1
    %v853 = vsel %vm198, %v806, 0
    %855 = vmatpush.bf16.msra.mxu0 0
    %856 = vmatpush.bf16.msra.mxu0 0
    %857 = vmatpush.bf16.msra.mxu0 0
    %858 = vmatpush.bf16.msra.mxu0 0
    %859 = vmatpush.bf16.msra.mxu0 %v837
    %860 = vmatpush.bf16.msra.mxu0 %v835
    %861 = vmatpush.bf16.msra.mxu0 %v833
    %862 = vmatpush.bf16.msra.mxu0 %v831
    %863 = vmatmul.bf16.gmra.mxu0 %v853
    %v864 = vpop.f32.mrf.mxu0
    %v865 = vadd.f32 %v848, %v864
    %v866 = vpop.f32.mrf.mxu0
    %867 = vdwg.mxu0
    %868 = vmatpush.bf16.msra.mxu0 0
    %869 = vmatpush.bf16.msra.mxu0 0
    %870 = vmatpush.bf16.msra.mxu0 0
    %871 = vmatpush.bf16.msra.mxu0 0
    %872 = vmatpush.bf16.msra.mxu0 %v838
    %873 = vmatpush.bf16.msra.mxu0 %v836
    %874 = vmatpush.bf16.msra.mxu0 %v834
    %875 = vmatpush.bf16.msra.mxu0 %v832
    %876 = vmatmul.bf16.gmra.mxu0 %v853
    %v877 = vpop.f32.mrf.mxu0
    %v878 = vadd.f32 %v849, %v877
    %v879 = vpop.f32.mrf.mxu0
    %880 = vdwg.mxu0
    %v881 = vtanh.pop %v865
    %v882 = vtanh.pop %v878
    %v883 = vmul.f32 %v881, 0.5
    %v884 = vadd.f32 %v883, 0.5
    %v885 = vmul.f32 %v882, 0.5
    %v886 = vadd.f32 %v885, 0.5
    %v887 = vmul.f32 %v884, %v785
    %v888 = vmul.f32 %v884, %v882
    %890 = vrot.lane.b32.xlu0 %v888, 64
    %v891 = vpop.permute.xlu0 %890
    %v893 = vadd.f32 %v887, %v891
    %v894 = vtanh.pop %v893
    %v895 = vmul.f32 %v886, %v894
    %897 = vrot.lane.b32.xlu0 %v895, 64
    %v898 = vpop.permute.xlu0 %897
    %900 = vst.msk [vmem:[#allocation2 + $0x6] sm:$0x1] %vm251, %v898
    %v901 = vpack.c.bf16 %v895, %v895
    %v902 = vld [vmem:[%s1 + $0x40] sm:$0xff]
    %v903 = vld [vmem:[%s1 + $0x48] sm:$0xff]
    %v904 = vld [vmem:[%s1 + $0x50] sm:$0xff]
    %v905 = vld [vmem:[%s1 + $0x58] sm:$0xff]
    %v906 = vld [vmem:[%s1 + $0x60] sm:$0xff]
    %v907 = vld [vmem:[%s1 + $0x68] sm:$0xff]
    %v908 = vld [vmem:[%s1 + $0x70] sm:$0xff]
    %v909 = vld [vmem:[%s1 + $0x78] sm:$0xff]
    %v910 = vld [vmem:[%s120] ss:$8 sm:$0x3]
    %912 = vrot.lane.b32.xlu0 %v901, 64
    %v913 = vpop.permute.xlu0 %912
    %v922 = vunpack.c.l.b16 %v902
    %v923 = vunpack.c.h.b16 %v902
    %v924 = vunpack.c.l.b16 %v903
    %v925 = vunpack.c.h.b16 %v903
    %v926 = vunpack.c.l.b16 %v904
    %v927 = vunpack.c.h.b16 %v904
    %v928 = vunpack.c.l.b16 %v905
    %v929 = vunpack.c.h.b16 %v905
    %v930 = vunpack.c.l.b16 %v906
    %v931 = vunpack.c.h.b16 %v906
    %v932 = vunpack.c.l.b16 %v907
    %v933 = vunpack.c.h.b16 %v907
    %v934 = vunpack.c.l.b16 %v908
    %v935 = vunpack.c.h.b16 %v908
    %v936 = vunpack.c.l.b16 %v909
    %v937 = vunpack.c.h.b16 %v909
    %v938 = vpack.c.b16 %v924, %v922
    %v939 = vpack.c.b16 %v925, %v923
    %v940 = vpack.c.b16 %v928, %v926
    %v941 = vpack.c.b16 %v929, %v927
    %v942 = vpack.c.b16 %v932, %v930
    %v943 = vpack.c.b16 %v933, %v931
    %v944 = vpack.c.b16 %v936, %v934
    %v945 = vpack.c.b16 %v937, %v935
    %v955 = vperm.slane %v910, 0
    %v956 = vperm.slane %v910, 1
    %v960 = vsel %vm198, %v913, 0
    %962 = vmatpush.bf16.msra.mxu0 0
    %963 = vmatpush.bf16.msra.mxu0 0
    %964 = vmatpush.bf16.msra.mxu0 0
    %965 = vmatpush.bf16.msra.mxu0 0
    %966 = vmatpush.bf16.msra.mxu0 %v944
    %967 = vmatpush.bf16.msra.mxu0 %v942
    %968 = vmatpush.bf16.msra.mxu0 %v940
    %969 = vmatpush.bf16.msra.mxu0 %v938
    %970 = vmatmul.bf16.gmra.mxu0 %v960
    %v971 = vpop.f32.mrf.mxu0
    %v972 = vadd.f32 %v955, %v971
    %v973 = vpop.f32.mrf.mxu0
    %974 = vdwg.mxu0
    %975 = vmatpush.bf16.msra.mxu0 0
    %976 = vmatpush.bf16.msra.mxu0 0
    %977 = vmatpush.bf16.msra.mxu0 0
    %978 = vmatpush.bf16.msra.mxu0 0
    %979 = vmatpush.bf16.msra.mxu0 %v945
    %980 = vmatpush.bf16.msra.mxu0 %v943
    %981 = vmatpush.bf16.msra.mxu0 %v941
    %982 = vmatpush.bf16.msra.mxu0 %v939
    %983 = vmatmul.bf16.gmra.mxu0 %v960
    %v984 = vpop.f32.mrf.mxu0
    %v985 = vadd.f32 %v956, %v984
    %v986 = vpop.f32.mrf.mxu0
    %987 = vdwg.mxu0
    %v988 = vtanh.pop %v972
    %v989 = vtanh.pop %v985
    %v990 = vmul.f32 %v988, 0.5
    %v991 = vadd.f32 %v990, 0.5
    %v992 = vmul.f32 %v989, 0.5
    %v993 = vadd.f32 %v992, 0.5
    %v994 = vmul.f32 %v991, %v893
    %v995 = vmul.f32 %v991, %v989
    %997 = vrot.lane.b32.xlu0 %v995, 64
    %v998 = vpop.permute.xlu0 %997
    %v1000 = vadd.f32 %v994, %v998
    %v1001 = vtanh.pop %v1000
    %v1002 = vmul.f32 %v993, %v1001
    %1004 = vrot.lane.b32.xlu0 %v1002, 64
    %v1005 = vpop.permute.xlu0 %1004
    %1007 = vst.msk [vmem:[#allocation2 + $0x7] sm:$0x1] %vm251, %v1005
    %v1008 = vld [vmem:[#allocation2] sm:$0xff]
    %v1009 = vpack.c.bf16 %v1008, %v1008
    %v1010 = vld [vmem:[%s1 + $0x80] sm:$0xf]
    %v1011 = vld [vmem:[%s1 + $0x88] sm:$0xf]
    %v1012 = vld [vmem:[%s1 + $0x90] sm:$0xf]
    %v1013 = vld [vmem:[%s1 + $0x98] sm:$0xf]
    %v1014 = vld [vmem:[%s1 + $0xa0] sm:$0xf]
    %v1015 = vld [vmem:[%s1 + $0xa8] sm:$0xf]
    %v1016 = vld [vmem:[%s1 + $0xb0] sm:$0xf]
    %v1017 = vld [vmem:[%s1 + $0xb8] sm:$0xf]
    %v1018 = vld [vmem:[%s2 + $0x3] sm:$0x1]
    %v1019 = vperm.slane %v1018, 0
    %v1028 = vunpack.c.l.b16 %v1010
    %v1029 = vunpack.c.l.b16 %v1011
    %v1030 = vunpack.c.l.b16 %v1012
    %v1031 = vunpack.c.l.b16 %v1013
    %v1032 = vunpack.c.l.b16 %v1014
    %v1033 = vunpack.c.l.b16 %v1015
    %v1034 = vunpack.c.l.b16 %v1016
    %v1035 = vunpack.c.l.b16 %v1017
    %v1036 = vpack.c.b16 %v1029, %v1028
    %v1037 = vpack.c.b16 %v1031, %v1030
    %v1038 = vpack.c.b16 %v1033, %v1032
    %v1039 = vpack.c.b16 %v1035, %v1034
    %v1045 = vsel %vm198, %v1009, 0
    %1047 = vmatpush.bf16.msra.mxu0 0
    %1048 = vmatpush.bf16.msra.mxu0 0
    %1049 = vmatpush.bf16.msra.mxu0 0
    %1050 = vmatpush.bf16.msra.mxu0 0
    %1051 = vmatpush.bf16.msra.mxu0 %v1039
    %1052 = vmatpush.bf16.msra.mxu0 %v1038
    %1053 = vmatpush.bf16.msra.mxu0 %v1037
    %1054 = vmatpush.bf16.msra.mxu0 %v1036
    %1055 = vmatmul.bf16.gmra.mxu0 %v1045
    %v1056 = vpop.f32.mrf.mxu0
    %v1057 = vadd.f32 %v1019, %v1056
    %v1058 = vpop.f32.mrf.mxu0
    %1059 = vdwg.mxu0
    %1060 = vst [vmem:[#allocation4] sm:$0xff] %v1057
    // Predicated region
    $region14: #{mini_layer_forward.1} parent=1 // pred_check
      _
    $region15: #{mini_layer_forward.1} parent=1 // pred_check_branch
      %1062 = sbr.rel (0) target = $region17
    $region16: #{mini_layer_forward.1} parent=1 // pred_region
      %1064 = vsyncadd [#allocation5], 0
      %s1066 = sshll.u32 [#allocation4], 4
      %s1067 = int_to_ptr.vmem [resolvable:$true] %s1066
      %s1068 = sshll.u32 %s3, 4
      %s1069 = int_to_ptr.hbm [resolvable:$true] %s1068
      %1071 = dma.vmem_to_hbm [thread:$0]  %s1067, 128, %s1069, [#allocation5]
    $region17: #{mini_layer_forward.1} parent=1 // pred_fallthru
      _
    // Predicated region
    $region18: #{mini_layer_forward.1} parent=1 // pred_check
      _
    $region19: #{mini_layer_forward.1} parent=1 // pred_check_branch
      %1073 = sbr.rel (0) target = $region21
    $region20: #{mini_layer_forward.1} parent=1 // pred_region
      %1075 = dma.done [#allocation5], 128
    $region21: #{mini_layer_forward.1} parent=1 // pred_fallthru
      _
    %1076 = vsyncpa [#allocation5], 1

</llo_original>
